<compile_context>
chip_gen: v7x
topology: tpu7x:2x2x1
jax: 0.10.0
libtpu: 0.0.40
codegen_flags: <defaults>
</compile_context>

<pallas_src>
import functools
import math

import jax
import jax.numpy as jnp
from jax.experimental import pallas as pl
from jax.experimental.pallas import tpu as pltpu


def _round_up(x, m):
    return ((x + m - 1) // m) * m


def _vmem_cap_bytes():
    """Physical VMEM per TensorCore, with 64 MiB (v7x) as a safe fallback."""
    try:
        info = pltpu.get_tpu_info()
        cap = int(getattr(info, "vmem_capacity_bytes", 0))
        if cap > 0:
            return cap
    except Exception:
        pass
    return 64 * 1024 * 1024


def _strong_gin_kernel(
    adj_ref, xw_ref, feati_ref, *refs, n_mlp1, n_mlp2, tk, feat_resident
):
    """refs = [b1_0, (w1_1,b1_1),...,(w2_i,b2_i)..., out_ref, acc_ref].

    adj_ref : [tm, tk] int8 adjacency tile (dest rows x src cols)
    xw_ref  : feat @ W1_0 in bf16; full array if feat_resident else [tk, h1_pad]
    feati_ref: [tm, d_pad] f32 residual features for this row tile
    """
    out_ref = refs[-2]
    acc_ref = refs[-1]
    params = refs[:-2]

    k = pl.program_id(1)

    @pl.when(k == 0)
    def _():
        acc_ref[...] = jnp.zeros_like(acc_ref)

    # --- message passing: partial sum of A @ (feat @ W1_0), bf16 MXU, f32 acc.
    # int8 adjacency widened in-kernel (VALU slots are idle in this mem-bound
    # kernel); 0/1 is exact in every dtype along the way.
    a = adj_ref[...].astype(jnp.float32).astype(jnp.bfloat16)
    if feat_resident:
        k0 = pl.multiple_of(k * tk, 128)
        xw = xw_ref[pl.ds(k0, tk), :]
    else:
        xw = xw_ref[...]
    acc_ref[...] += jnp.dot(a, xw, preferred_element_type=jnp.float32)

    # --- epilogue only on the final k step: finish MLP1 -> residual -> MLP2.
    @pl.when(k == pl.num_programs(1) - 1)
    def _():
        h = acc_ref[...] + params[0][...]              # layer 0 of MLP1: + b1_0
        idx = 1
        for _i in range(1, n_mlp1):                    # remaining MLP1 layers
            h = jnp.maximum(h, 0.0)                    # ReLU between layers
            w = params[idx][...]                       # bf16 [in_pad, out_pad]
            b = params[idx + 1][...]                   # f32  [1, out_pad]
            idx += 2
            h = jnp.dot(h.astype(jnp.bfloat16), w,
                        preferred_element_type=jnp.float32) + b
        h = feati_ref[...] + h                         # residual (f32 feat)
        for i in range(n_mlp2):                        # MLP2
            w = params[idx][...]
            b = params[idx + 1][...]
            idx += 2
            h = jnp.dot(h.astype(jnp.bfloat16), w,
                        preferred_element_type=jnp.float32) + b
            if i < n_mlp2 - 1:
                h = jnp.maximum(h, 0.0)
        out_ref[...] = h.astype(out_ref.dtype)


def strong_gin_forward(
    adj, feat, mlp1_params, mlp2_params, *, tm=None, tk=None, feat_resident=None
):
    """adj: [N, N] dense 0/1 (dest <- src), feat: [N, D] float32.

    mlp*_params: list of (W [in, out], b [1, out]) — W is the transposed
    PyTorch [out, in] weight so the math is x @ W + b.
    Returns [N, out_dim_of_mlp2] float32.
    """
    N, D = feat.shape
    assert mlp1_params[0][0].shape[0] == D, "MLP1 input dim must match feat dim"
    out_dim = mlp2_params[-1][0].shape[1]

    # ---- tile selection: tm sublane-friendly, tk lane multiple of 128.
    # Defaults favor big tiles (amortize ~0.35us/step, keep the MXU reduction
    # ramped); demo overrides with small tiles to exercise the grid.
    if tk is None:
        tk = min(1024, _round_up(N, 256))
    if tm is None:
        tm = min(256, _round_up(N, 256))
    assert tm % 32 == 0 and tk % 128 == 0, "tm % 32 == 0 and tk % 128 == 0 required"

    n_rows_pad = _round_up(N, tm)   # padded dest-node axis
    n_cols_pad = _round_up(N, tk)   # padded src-node (reduction) axis
    d_pad = _round_up(D, 128)

    h1 = mlp1_params[0][0].shape[1]          # MLP1 first-layer output dim
    h1_pad = _round_up(h1, 128)
    out1_pad = _round_up(mlp1_params[-1][0].shape[1], 128)
    assert out1_pad == d_pad, (
        "residual add requires padded MLP1 output dim == padded feat dim "
        f"(got {out1_pad} vs {d_pad})"
    )

    # ---- pad params to 128-lane-dense shapes (zero padding keeps math exact)
    def pad_wb(w, b):
        din, dout = w.shape
        din_p, dout_p = _round_up(din, 128), _round_up(dout, 128)
        w_p = jnp.pad(w.astype(jnp.float32), ((0, din_p - din), (0, dout_p - dout)))
        b_p = jnp.pad(
            b.astype(jnp.float32).reshape(1, -1), ((0, 0), (0, dout_p - dout))
        )
        return w_p, b_p

    # MLP1 layer 0's weight is folded into the wrapper pre-multiply; only its
    # bias enters the kernel.  All other weights go in as bf16 (native MXU path
    # with f32 accumulation), biases stay f32.
    _, b1_0_pad = pad_wb(*mlp1_params[0])
    rest = [pad_wb(w, b) for (w, b) in mlp1_params[1:]] + [
        pad_wb(w, b) for (w, b) in mlp2_params
    ]

    flat_params = [b1_0_pad]
    param_specs = [pl.BlockSpec(b1_0_pad.shape, lambda i, k: (0, 0))]
    for w_p, b_p in rest:
        w_bf = w_p.astype(jnp.bfloat16)
        flat_params += [w_bf, b_p]
        param_specs += [
            pl.BlockSpec(w_bf.shape, lambda i, k: (0, 0)),   # resident in VMEM
            pl.BlockSpec(b_p.shape, lambda i, k: (0, 0)),
        ]
    out_pad = rest[-1][0].shape[1] if rest else h1_pad

    # ---- inputs: cast BEFORE padding (no transient padded-f32 N^2 copy).
    adj_i8 = jnp.pad(
        adj.astype(jnp.int8), ((0, n_rows_pad - N), (0, n_cols_pad - N))
    )
    # Algebraic refactor: pre-multiply feat @ W1_0 once in f32, stream as bf16.
    xw = jnp.dot(
        feat.astype(jnp.float32),
        mlp1_params[0][0].astype(jnp.float32),
        precision=jax.lax.Precision.HIGHEST,
    )
    xw_bf16 = jnp.pad(
        xw.astype(jnp.bfloat16), ((0, n_cols_pad - N), (0, h1_pad - h1))
    )
    feat_res = jnp.pad(
        feat.astype(jnp.float32), ((0, n_rows_pad - N), (0, d_pad - D))
    )

    # ---- keep feat@W1_0 VMEM-resident if it comfortably fits (conservative
    # budget so even a double-buffered copy stays small on v7x's 64 MiB VMEM).
    xw_bytes = int(xw_bf16.size) * 2
    if feat_resident is None:
        feat_resident = xw_bytes <= 6 * 1024 * 1024

    if feat_resident:
        xw_spec = pl.BlockSpec((n_cols_pad, h1_pad), lambda i, k: (0, 0))
    else:
        xw_spec = pl.BlockSpec((tk, h1_pad), lambda i, k: (k, 0))

    grid = (n_rows_pad // tm, n_cols_pad // tk)
    kernel = functools.partial(
        _strong_gin_kernel,
        n_mlp1=len(mlp1_params),
        n_mlp2=len(mlp2_params),
        tk=tk,
        feat_resident=feat_resident,
    )

    # ---- cost estimate (include the feat re-stream when it is not resident)
    param_bytes = sum(int(p.size) * p.dtype.itemsize for p in flat_params)
    epi_flops = sum(2 * n_rows_pad * w.shape[0] * w.shape[1] for w, _ in rest)
    flops = 2 * n_rows_pad * n_cols_pad * h1_pad + epi_flops
    xw_stream_bytes = xw_bytes * (1 if feat_resident else (n_rows_pad // tm))
    bytes_accessed = (
        int(adj_i8.size) * 1
        + xw_stream_bytes
        + int(feat_res.size) * 4
        + n_rows_pad * out_pad * 4
        + param_bytes
    )

    # ---- VMEM budget: double-buffered tiles + resident operands + accumulator
    xw_vmem = (2 * xw_bytes) if feat_resident else (2 * tk * h1_pad * 2)
    vmem_bytes = (
        2 * tm * tk * 1            # adj tile (int8), double-buffered
        + xw_vmem                  # feat @ W1_0 (bf16)
        + 2 * tm * d_pad * 4       # residual feat tile (f32)
        + 2 * tm * out_pad * 4     # output tile (f32)
        + tm * h1_pad * 4          # accumulator scratch
        + 2 * param_bytes          # resident params (assume double-buffered)
    )
    cap = (_vmem_cap_bytes() * 3) // 4        # leave 25% headroom for Mosaic
    vmem_limit = int(min(max(int(1.5 * vmem_bytes), 32 * 1024 * 1024), cap))

    out = pl.pallas_call(
        kernel,
        out_shape=jax.ShapeDtypeStruct((n_rows_pad, out_pad), jnp.float32),
        grid_spec=pltpu.PrefetchScalarGridSpec(
            num_scalar_prefetch=0,
            grid=grid,
            in_specs=[
                pl.BlockSpec((tm, tk), lambda i, k: (i, k)),      # adjacency tile
                xw_spec,                                          # feat @ W1_0
                pl.BlockSpec((tm, d_pad), lambda i, k: (i, 0)),   # residual feat
            ]
            + param_specs,
            out_specs=pl.BlockSpec((tm, out_pad), lambda i, k: (i, 0)),
            scratch_shapes=[pltpu.VMEM((tm, h1_pad), jnp.float32)],
        ),
        compiler_params=pltpu.CompilerParams(
            dimension_semantics=("parallel", "arbitrary"),
            vmem_limit_bytes=vmem_limit,
        ),
        cost_estimate=pl.CostEstimate(
            flops=int(flops), transcendentals=0, bytes_accessed=int(bytes_accessed)
        ),
    )(adj_i8, xw_bf16, feat_res, *flat_params)

    return out[:N, :out_dim]


def make_mlp_params(key, num_layers, input_dim, hidden_dim, output_dim):
    """Deterministic MLP parameters matching torch.nn.Linear shapes.

    Returns list of (W [in, out], b [1, out]) — W is the transpose of the
    PyTorch [out, in] weight so the math is x @ W + b.
    """
    if num_layers < 1:
        raise ValueError("number of layers should be positive!")
    dims = (
        [(input_dim, output_dim)]
        if num_layers == 1
        else [(input_dim, hidden_dim)]
        + [(hidden_dim, hidden_dim)] * (num_layers - 2)
        + [(hidden_dim, output_dim)]
    )
    params = []
    for (din, dout) in dims:
        key, kw, kb = jax.random.split(key, 3)
        bound = 1.0 / jnp.sqrt(jnp.float32(din))
        w = jax.random.uniform(kw, (din, dout), jnp.float32, -bound, bound)
        b = jax.random.uniform(kb, (1, dout), jnp.float32, -bound, bound)
        params.append((w, b))
    return params


def strong_gin_ref(adj, feat, mlp1_params, mlp2_params):
    """Pure-JAX reference that mirrors the kernel's dtype casts (bf16 operands,
    f32 accumulation) so the comparison isolates kernel mechanics."""
    f32, bf16 = jnp.float32, jnp.bfloat16
    hp = jax.lax.Precision.HIGHEST

    def bdot(x, w):
        return jnp.dot(x.astype(bf16).astype(f32), w.astype(bf16).astype(f32),
                       precision=hp)

    feat32 = feat.astype(f32)
    w1_0, b1_0 = mlp1_params[0]
    xw = jnp.dot(feat32, w1_0.astype(f32), precision=hp)
    xw = xw.astype(bf16).astype(f32)                       # wrapper bf16 cast
    a = adj.astype(jnp.int8).astype(f32)                   # 0/1 exact
    h = jnp.dot(a, xw, precision=hp) + b1_0.reshape(1, -1)
    for i, (w, b) in enumerate(mlp1_params[1:]):
        h = jnp.maximum(h, 0.0)
        h = bdot(h, w) + b.reshape(1, -1)
    h = feat32 + h
    for i, (w, b) in enumerate(mlp2_params):
        h = bdot(h, w) + b.reshape(1, -1)
        if i < len(mlp2_params) - 1:
            h = jnp.maximum(h, 0.0)
    return h


if __name__ == "__main__":
    # Small deterministic problem: N=200 nodes, input_dim=16, hidden_layers=32,
    # number_layers=2 (mirrors StrongGIN(16, 2, 32)).  tm=tk=128 gives a (2, 2)
    # grid so the k-reduction accumulator, the epilogue, the in-kernel slicing
    # of the resident feat@W1 operand, and the parallel row axis are all
    # exercised (production sizes use the larger defaults when tm/tk are None).
    N, INPUT_DIM, HIDDEN_LAYERS, NUM_LAYERS = 200, 16, 32, 2

    key = jax.random.PRNGKey(0)
    k_feat, k_adj, k_m1, k_m2 = jax.random.split(key, 4)

    feat = jax.random.normal(k_feat, (N, INPUT_DIM), jnp.float32)
    adj = (jax.random.uniform(k_adj, (N, N)) < 0.05).astype(jnp.float32)

    mlp1_params = make_mlp_params(k_m1, NUM_LAYERS, INPUT_DIM, INPUT_DIM, INPUT_DIM)
    mlp2_params = make_mlp_params(
        k_m2, NUM_LAYERS, INPUT_DIM, HIDDEN_LAYERS, HIDDEN_LAYERS
    )

    ref = strong_gin_ref(adj, feat, mlp1_params, mlp2_params)

    # Resident-feat path (default for small graphs).
    out = strong_gin_forward(adj, feat, mlp1_params, mlp2_params, tm=128, tk=128)
    out = jax.block_until_ready(out)
    assert out.shape == (N, HIDDEN_LAYERS)
    assert jnp.allclose(out, ref, atol=2e-2, rtol=2e-2), (
        "resident-path mismatch vs JAX reference; max abs err = "
        + str(float(jnp.max(jnp.abs(out - ref))))
    )

    # Streamed-feat fallback path (used when feat @ W1_0 is too big for VMEM).
    out2 = strong_gin_forward(
        adj, feat, mlp1_params, mlp2_params, tm=128, tk=128, feat_resident=False
    )
    out2 = jax.block_until_ready(out2)
    assert jnp.allclose(out2, ref, atol=2e-2, rtol=2e-2), (
        "streamed-path mismatch vs JAX reference; max abs err = "
        + str(float(jnp.max(jnp.abs(out2 - ref))))
    )

    print("KERNEL_OK")
</pallas_src>

<mosaic_0001>
module attributes {stable_mosaic.version = 11 : i64} {
  func.func @_strong_gin_kernel(%arg0: i32, %arg1: i32, %arg2: memref<128x128xi8, #tpu.memory_space<vmem>>, %arg3: memref<256x128xbf16, #tpu.memory_space<vmem>>, %arg4: memref<128x128xf32, #tpu.memory_space<vmem>>, %arg5: memref<1x128xf32, #tpu.memory_space<vmem>>, %arg6: memref<128x128xbf16, #tpu.memory_space<vmem>>, %arg7: memref<1x128xf32, #tpu.memory_space<vmem>>, %arg8: memref<128x128xbf16, #tpu.memory_space<vmem>>, %arg9: memref<1x128xf32, #tpu.memory_space<vmem>>, %arg10: memref<128x128xbf16, #tpu.memory_space<vmem>>, %arg11: memref<1x128xf32, #tpu.memory_space<vmem>>, %arg12: memref<128x128xf32, #tpu.memory_space<vmem>>, %arg13: memref<128x128xf32, #tpu.memory_space<vmem>>) attributes {dimension_semantics = [#tpu.dimension_semantics<parallel>, #tpu.dimension_semantics<arbitrary>], iteration_bounds = array<i64: 2, 2>, scalar_prefetch = 0 : i64, scratch_operands = 1 : i64, tpu.core_type = #tpu.core_type<tc>, window_params = [{transform_indices = @transform_0, window_bounds = array<i64: 128, 128>}, {pipeline_mode = #tpu.pipeline_mode<synchronous>, transform_indices = @transform_1, window_bounds = array<i64: 256, 128>}, {transform_indices = @transform_2, window_bounds = array<i64: 128, 128>}, {pipeline_mode = #tpu.pipeline_mode<synchronous>, transform_indices = @transform_3, window_bounds = array<i64: 1, 128>}, {pipeline_mode = #tpu.pipeline_mode<synchronous>, transform_indices = @transform_4, window_bounds = array<i64: 128, 128>}, {pipeline_mode = #tpu.pipeline_mode<synchronous>, transform_indices = @transform_5, window_bounds = array<i64: 1, 128>}, {pipeline_mode = #tpu.pipeline_mode<synchronous>, transform_indices = @transform_6, window_bounds = array<i64: 128, 128>}, {pipeline_mode = #tpu.pipeline_mode<synchronous>, transform_indices = @transform_7, window_bounds = array<i64: 1, 128>}, {pipeline_mode = #tpu.pipeline_mode<synchronous>, transform_indices = @transform_8, window_bounds = array<i64: 128, 128>}, {pipeline_mode = #tpu.pipeline_mode<synchronous>, transform_indices = @transform_9, window_bounds = array<i64: 1, 128>}, {transform_indices = @transform_10, window_bounds = array<i64: 128, 128>}]} {
    %c0_i32 = arith.constant 0 : i32
    %0 = arith.cmpi eq, %arg1, %c0_i32 : i32
    %1 = arith.extui %0 : i1 to i32
    %c0_i32_0 = arith.constant 0 : i32
    %2 = arith.cmpi ne, %1, %c0_i32_0 : i32
    scf.if %2 {
      %cst_8 = arith.constant 0.000000e+00 : f32
      %17 = vector.broadcast %cst_8 : f32 to vector<128x128xf32>
      %c0_9 = arith.constant 0 : index
      %c0_10 = arith.constant 0 : index
      %18 = vector.load %arg13[%c0_9, %c0_10] : memref<128x128xf32, #tpu.memory_space<vmem>>, vector<128x128xf32>
      tpu.vector_store %arg13[%c0_9, %c0_10], %17 {strides = array<i32>} : memref<128x128xf32, #tpu.memory_space<vmem>>, vector<128x128xf32>,
    } else {
    }
    %c0 = arith.constant 0 : index
    %c0_1 = arith.constant 0 : index
    %3 = vector.load %arg2[%c0, %c0_1] : memref<128x128xi8, #tpu.memory_space<vmem>>, vector<128x128xi8>
    %4 = arith.sitofp %3 : vector<128x128xi8> to vector<128x128xf32>
    %5 = arith.truncf %4 : vector<128x128xf32> to vector<128x128xbf16>
    %c128_i32 = arith.constant 128 : i32
    %6 = arith.muli %arg1, %c128_i32 : i32
    %7 = tpu.assume_multiple %6, 128 : i32
    %8 = arith.index_cast %7 : i32 to index
    %c0_2 = arith.constant 0 : index
    %9 = vector.load %arg3[%8, %c0_2] : memref<256x128xbf16, #tpu.memory_space<vmem>>, vector<128x128xbf16>
    %c0_3 = arith.constant 0 : index
    %c0_4 = arith.constant 0 : index
    %10 = vector.load %arg13[%c0_3, %c0_4] : memref<128x128xf32, #tpu.memory_space<vmem>>, vector<128x128xf32>
    %cst = arith.constant dense<0.000000e+00> : vector<128x128xf32>
    %11 = tpu.matmul %5, %9, %cst {dimension_numbers = #tpu.dot_dimension_numbers<[1], [0], [0], [1], [0, 0, 1, 1], [], []>} : vector<128x128xbf16>, vector<128x128xbf16>, vector<128x128xf32> -> vector<128x128xf32>
    %12 = arith.addf %10, %11 : vector<128x128xf32>
    %c0_5 = arith.constant 0 : index
    %c0_6 = arith.constant 0 : index
    %13 = vector.load %arg13[%c0_5, %c0_6] : memref<128x128xf32, #tpu.memory_space<vmem>>, vector<128x128xf32>
    tpu.vector_store %arg13[%c0_5, %c0_6], %12 {strides = array<i32>} : memref<128x128xf32, #tpu.memory_space<vmem>>, vector<128x128xf32>,
    %c1_i32 = arith.constant 1 : i32
    %14 = arith.cmpi eq, %arg1, %c1_i32 : i32
    %15 = arith.extui %14 : i1 to i32
    %c0_i32_7 = arith.constant 0 : i32
    %16 = arith.cmpi ne, %15, %c0_i32_7 : i32
    scf.if %16 {
      %c0_8 = arith.constant 0 : index
      %c0_9 = arith.constant 0 : index
      %17 = vector.load %arg13[%c0_8, %c0_9] : memref<128x128xf32, #tpu.memory_space<vmem>>, vector<128x128xf32>
      %c0_10 = arith.constant 0 : index
      %c0_11 = arith.constant 0 : index
      %18 = vector.load %arg5[%c0_10, %c0_11] : memref<1x128xf32, #tpu.memory_space<vmem>>, vector<1x128xf32>
      %19 = vector.broadcast %18 : vector<1x128xf32> to vector<128x128xf32>
      %20 = arith.addf %17, %19 : vector<128x128xf32>
      %cst_12 = arith.constant 0.000000e+00 : f32
      %21 = vector.broadcast %cst_12 : f32 to vector<128x128xf32>
      %22 = arith.maximumf %20, %21 : vector<128x128xf32>
      %c0_13 = arith.constant 0 : index
      %c0_14 = arith.constant 0 : index
      %23 = vector.load %arg6[%c0_13, %c0_14] : memref<128x128xbf16, #tpu.memory_space<vmem>>, vector<128x128xbf16>
      %c0_15 = arith.constant 0 : index
      %c0_16 = arith.constant 0 : index
      %24 = vector.load %arg7[%c0_15, %c0_16] : memref<1x128xf32, #tpu.memory_space<vmem>>, vector<1x128xf32>
      %25 = arith.truncf %22 : vector<128x128xf32> to vector<128x128xbf16>
      %cst_17 = arith.constant dense<0.000000e+00> : vector<128x128xf32>
      %26 = tpu.matmul %25, %23, %cst_17 {dimension_numbers = #tpu.dot_dimension_numbers<[1], [0], [0], [1], [0, 0, 1, 1], [], []>} : vector<128x128xbf16>, vector<128x128xbf16>, vector<128x128xf32> -> vector<128x128xf32>
      %27 = vector.broadcast %24 : vector<1x128xf32> to vector<128x128xf32>
      %28 = arith.addf %26, %27 : vector<128x128xf32>
      %c0_18 = arith.constant 0 : index
      %c0_19 = arith.constant 0 : index
      %29 = vector.load %arg4[%c0_18, %c0_19] : memref<128x128xf32, #tpu.memory_space<vmem>>, vector<128x128xf32>
      %30 = arith.addf %29, %28 : vector<128x128xf32>
      %c0_20 = arith.constant 0 : index
      %c0_21 = arith.constant 0 : index
      %31 = vector.load %arg8[%c0_20, %c0_21] : memref<128x128xbf16, #tpu.memory_space<vmem>>, vector<128x128xbf16>
      %c0_22 = arith.constant 0 : index
      %c0_23 = arith.constant 0 : index
      %32 = vector.load %arg9[%c0_22, %c0_23] : memref<1x128xf32, #tpu.memory_space<vmem>>, vector<1x128xf32>
      %33 = arith.truncf %30 : vector<128x128xf32> to vector<128x128xbf16>
      %cst_24 = arith.constant dense<0.000000e+00> : vector<128x128xf32>
      %34 = tpu.matmul %33, %31, %cst_24 {dimension_numbers = #tpu.dot_dimension_numbers<[1], [0], [0], [1], [0, 0, 1, 1], [], []>} : vector<128x128xbf16>, vector<128x128xbf16>, vector<128x128xf32> -> vector<128x128xf32>
      %35 = vector.broadcast %32 : vector<1x128xf32> to vector<128x128xf32>
      %36 = arith.addf %34, %35 : vector<128x128xf32>
      %cst_25 = arith.constant 0.000000e+00 : f32
      %37 = vector.broadcast %cst_25 : f32 to vector<128x128xf32>
      %38 = arith.maximumf %36, %37 : vector<128x128xf32>
      %c0_26 = arith.constant 0 : index
      %c0_27 = arith.constant 0 : index
      %39 = vector.load %arg10[%c0_26, %c0_27] : memref<128x128xbf16, #tpu.memory_space<vmem>>, vector<128x128xbf16>
      %c0_28 = arith.constant 0 : index
      %c0_29 = arith.constant 0 : index
      %40 = vector.load %arg11[%c0_28, %c0_29] : memref<1x128xf32, #tpu.memory_space<vmem>>, vector<1x128xf32>
      %41 = arith.truncf %38 : vector<128x128xf32> to vector<128x128xbf16>
      %cst_30 = arith.constant dense<0.000000e+00> : vector<128x128xf32>
      %42 = tpu.matmul %41, %39, %cst_30 {dimension_numbers = #tpu.dot_dimension_numbers<[1], [0], [0], [1], [0, 0, 1, 1], [], []>} : vector<128x128xbf16>, vector<128x128xbf16>, vector<128x128xf32> -> vector<128x128xf32>
      %43 = vector.broadcast %40 : vector<1x128xf32> to vector<128x128xf32>
      %44 = arith.addf %42, %43 : vector<128x128xf32>
      %c0_31 = arith.constant 0 : index
      %c0_32 = arith.constant 0 : index
      %45 = vector.load %arg12[%c0_31, %c0_32] : memref<128x128xf32, #tpu.memory_space<vmem>>, vector<128x128xf32>
      tpu.vector_store %arg12[%c0_31, %c0_32], %44 {strides = array<i32>} : memref<128x128xf32, #tpu.memory_space<vmem>>, vector<128x128xf32>,
    } else {
    }
    return
  }
  func.func @transform_0(%arg0: i32, %arg1: i32) -> (i32, i32) {
    %c0_i32 = arith.constant 0 : i32
    return %arg0, %arg1 : i32, i32
  }
  func.func @transform_1(%arg0: i32, %arg1: i32) -> (i32, i32) {
    %c0_i32 = arith.constant 0 : i32
    %c0_i32_0 = arith.constant 0 : i32
    %c0_i32_1 = arith.constant 0 : i32
    return %c0_i32, %c0_i32_0 : i32, i32
  }
  func.func @transform_2(%arg0: i32, %arg1: i32) -> (i32, i32) {
    %c0_i32 = arith.constant 0 : i32
    %c0_i32_0 = arith.constant 0 : i32
    return %arg0, %c0_i32 : i32, i32
  }
  func.func @transform_3(%arg0: i32, %arg1: i32) -> (i32, i32) {
    %c0_i32 = arith.constant 0 : i32
    %c0_i32_0 = arith.constant 0 : i32
    %c0_i32_1 = arith.constant 0 : i32
    return %c0_i32, %c0_i32_0 : i32, i32
  }
  func.func @transform_4(%arg0: i32, %arg1: i32) -> (i32, i32) {
    %c0_i32 = arith.constant 0 : i32
    %c0_i32_0 = arith.constant 0 : i32
    %c0_i32_1 = arith.constant 0 : i32
    return %c0_i32, %c0_i32_0 : i32, i32
  }
  func.func @transform_5(%arg0: i32, %arg1: i32) -> (i32, i32) {
    %c0_i32 = arith.constant 0 : i32
    %c0_i32_0 = arith.constant 0 : i32
    %c0_i32_1 = arith.constant 0 : i32
    return %c0_i32, %c0_i32_0 : i32, i32
  }
  func.func @transform_6(%arg0: i32, %arg1: i32) -> (i32, i32) {
    %c0_i32 = arith.constant 0 : i32
    %c0_i32_0 = arith.constant 0 : i32
    %c0_i32_1 = arith.constant 0 : i32
    return %c0_i32, %c0_i32_0 : i32, i32
  }
  func.func @transform_7(%arg0: i32, %arg1: i32) -> (i32, i32) {
    %c0_i32 = arith.constant 0 : i32
    %c0_i32_0 = arith.constant 0 : i32
    %c0_i32_1 = arith.constant 0 : i32
    return %c0_i32, %c0_i32_0 : i32, i32
  }
  func.func @transform_8(%arg0: i32, %arg1: i32) -> (i32, i32) {
    %c0_i32 = arith.constant 0 : i32
    %c0_i32_0 = arith.constant 0 : i32
    %c0_i32_1 = arith.constant 0 : i32
    return %c0_i32, %c0_i32_0 : i32, i32
  }
  func.func @transform_9(%arg0: i32, %arg1: i32) -> (i32, i32) {
    %c0_i32 = arith.constant 0 : i32
    %c0_i32_0 = arith.constant 0 : i32
    %c0_i32_1 = arith.constant 0 : i32
    return %c0_i32, %c0_i32_0 : i32, i32
  }
  func.func @transform_10(%arg0: i32, %arg1: i32) -> (i32, i32) {
    %c0_i32 = arith.constant 0 : i32
    %c0_i32_0 = arith.constant 0 : i32
    return %arg0, %c0_i32 : i32, i32
  }
}

</mosaic_0001>

<llo_original>
// kernel: tpu_custom_call.1
$region0: #{tpu_custom_call.1}
  #allocation0 [shape = 'u32[]', space=smem, size = 0x4, offset = 0x4, fixed_abs, tag = 'smem constant byte address 0x4 - core index']
  #allocation1 [shape = 'u32[144,128]{1,0:T(1,128)}', space=vmem, size = 0x12000, scoped, tag = 'internal scratch']
  #allocation2 [shape = 'f32[128,128]{1,0:T(8,128)}', space=vmem, size = 0x10000, scoped, tag = 'scratch operand']
  %s0 = inlined_call_operand.hbm [shape: s8[256,256], index: 0, kind: input, shape index: {}]
  %s1 = inlined_call_operand.hbm [shape: bf16[256,128], index: 1, kind: input, shape index: {}]
  %s2 = inlined_call_operand.hbm [shape: f32[256,128], index: 2, kind: input, shape index: {}]
  %s3 = inlined_call_operand.vmem [shape: f32[1,128], index: 3, kind: input, shape index: {}]
  %s4 = inlined_call_operand.hbm [shape: bf16[128,128], index: 4, kind: input, shape index: {}]
  %s5 = inlined_call_operand.vmem [shape: f32[1,128], index: 5, kind: input, shape index: {}]
  %s6 = inlined_call_operand.hbm [shape: bf16[128,128], index: 6, kind: input, shape index: {}]
  %s7 = inlined_call_operand.vmem [shape: f32[1,128], index: 7, kind: input, shape index: {}]
  %s8 = inlined_call_operand.hbm [shape: bf16[128,128], index: 8, kind: input, shape index: {}]
  %s9 = inlined_call_operand.vmem [shape: f32[1,128], index: 9, kind: input, shape index: {}]
  %s10 = inlined_call_operand.hbm [shape: f32[256,128], index: 10, kind: output, shape index: {}]
  %s11 = sld [smem:[#allocation0]]
  $region105: #{tpu_custom_call.1} parent=0
    _
  %s13 = ssub.s32 1, %s11
  %s14 = scalar_select 0, %s13, %s11
  $region1: #{tpu_custom_call.1} parent=0
    #allocation3 [shape = 'u8[32768]{0}', space=vmem, size = 0x8000, scoped, tag = 'input window, operand 0']
    #allocation4 [shape = 's32[2]{0}', space=sflag, size = 0x8, scoped, tag = 'scoped memory for tpu_custom_call.1']
    #allocation5 [shape = 's32[2]{0}', space=sflag, size = 0x8, scoped, tag = 'scoped memory for tpu_custom_call.1']
    #allocation6 [shape = 'u8[65536]{0}', space=vmem, size = 0x10000, scoped, tag = 'input window, operand 1, single buffered']
    #allocation7 [shape = 's32[1]{0}', space=sflag, size = 0x4, scoped, tag = 'scoped memory for tpu_custom_call.1']
    #allocation8 [shape = 'u8[131072]{0}', space=vmem, size = 0x20000, scoped, tag = 'input window, operand 2']
    #allocation9 [shape = 'u8[32768]{0}', space=vmem, size = 0x8000, scoped, tag = 'input window, operand 4, single buffered']
    #allocation10 [shape = 'u8[32768]{0}', space=vmem, size = 0x8000, scoped, tag = 'input window, operand 6, single buffered']
    #allocation11 [shape = 's32[1]{0}', space=sflag, size = 0x4, scoped, tag = 'scoped memory for tpu_custom_call.1']
    #allocation12 [shape = 'u8[32768]{0}', space=vmem, size = 0x8000, scoped, tag = 'input window, operand 8, single buffered']
    #allocation13 [shape = 'u8[131072]{0}', space=vmem, size = 0x20000, scoped, tag = 'output window, operand 0']
    %15 = vsyncpa [#allocation4], 0
    %s16 = scalar_lea.sflag [#allocation4], 1
    %17 = vsyncpa %s16, 0
    %18 = vsyncpa [#allocation7], 0
    %19 = vsyncpa [#allocation11], 0
    %20 = vsyncpa [#allocation5], 0
    %s21 = scalar_lea.sflag [#allocation5], 1
    %22 = vsyncpa %s21, 0
    loop: start=0, step=1, limit=6
    $region2: #{tpu_custom_call.1} parent=1 // loop_pre_header
      _
    $region3: #{tpu_custom_call.1} parent=1 // loop_header
      %s24 = sphi 0, %s28
      %p25 = scmp.ge.s32.totalorder %s24, 6
      %s31 = sphi 0, %s43
      %s32 = sphi 0, %s39
      %s33 = sphi 0, %s31
      %s34 = sphi 0, %s32
      %s35 = sphi 0, %s33
      %s36 = sphi 0, %s34
      %s48 = sphi 0, %s50
      %s51 = sphi 0, %s48
      %s52 = sphi 0, %s51
      %s68 = sphi 0, %s52
      %s72 = sphi 0, %s72
      %s74 = sphi 0, %s72
      %s75 = sphi 0, %s74
      %s89 = sphi 0, %s75
      %s95 = sphi 0, %s97
      %s98 = sphi 0, %s95
      %s99 = sphi 0, %s98
      %s115 = sphi 0, %s99
      %s119 = sphi 0, %s119
      %s121 = sphi 0, %s119
      %s122 = sphi 0, %s121
      %s136 = sphi 0, %s122
      %s140 = sphi 0, %s140
      %s142 = sphi 0, %s140
      %s143 = sphi 0, %s142
      %s157 = sphi 0, %s143
      %s161 = sphi 0, %s161
      %s163 = sphi 0, %s161
      %s164 = sphi 0, %s163
      %s178 = sphi 0, %s164
      %s182 = sphi 0, %s182
      %s184 = sphi 0, %s182
      %s185 = sphi 0, %s184
      %s199 = sphi 0, %s185
      %s203 = sphi 0, %s203
      %s205 = sphi 0, %s203
      %s206 = sphi 0, %s205
      %s220 = sphi 0, %s206
      %s224 = sphi 0, %s224
      %s226 = sphi 0, %s224
      %s227 = sphi 0, %s226
      %s241 = sphi 0, %s227
      %s245 = sphi 0, %s245
      %s247 = sphi 0, %s245
      %s248 = sphi 0, %s247
      %s262 = sphi 0, %s248
      %s268 = sphi 0, %s270
      %s271 = sphi 0, %s268
      %s272 = sphi 0, %s271
      %s288 = sphi 0, %s272
    $region4: #{tpu_custom_call.1} parent=1 // loop_header_branch
      %27 = sbr.rel (%p25) target = $region8
    $region5: #{tpu_custom_call.1} parent=1 // loop_body
      %s29 = ssub.s32 %s24, 1
      %s30 = ssub.s32 %s24, 2
      %s37 = sadd.s32 1, %s32
      %p38 = scmp.ge.s32.totalorder %s37, 2
      %s39 = scalar_select %p38, 0, %s37
      %s40 = sadd.s32 1, %s31
      %s41 = scalar_select %p38, %s40, %s31
      %p42 = scmp.ge.s32.totalorder %s41, 2
      %s43 = scalar_select %p42, 0, %s41
      %s44 = ssub.s32 %s31, %s43
      %s45 = ssub.s32 %s32, %s39
      %s46 = sor.u32 %s44, %s45
      %p47 = scmp.eq.s32.totalorder %s46, 0
      %s49 = sadd.s32 %s48, 1
      %s50 = scalar_select %p47, %s48, %s49
      %p53 = pneg %p47
      %p54 = scmp.eq.s32.totalorder %s24, 3
      %p55 = por %p53, %p54
      %p56 = scmp.ne.s32.totalorder %s48, %s51
      %p57 = scmp.eq.s32.totalorder %s24, 0
      %p58 = por %p56, %p57
      %p59 = scmp.ne.s32.totalorder %s48, %s51
      %p60 = scmp.eq.s32.totalorder %s29, 3
      %p61 = por %p59, %p60
      %p62 = scmp.ne.s32.totalorder %s51, %s52
      %p63 = scmp.eq.s32.totalorder %s29, 0
      %p64 = por %p62, %p63
      %p65 = scmp.ne.s32.totalorder %s51, %s52
      %p66 = scmp.eq.s32.totalorder %s30, 3
      %p67 = por %p65, %p66
      %p69 = scmp.ne.s32.totalorder %s52, %s68
      %p70 = scmp.eq.s32.totalorder %s30, 0
      %p71 = por %p69, %p70
      %s73 = sadd.s32 %s72, 1
      %p76 = scmp.eq.s32.totalorder %s24, 3
      %p77 = scmp.ne.s32.totalorder %s72, %s74
      %p78 = scmp.eq.s32.totalorder %s24, 0
      %p79 = por %p77, %p78
      %p80 = scmp.ne.s32.totalorder %s72, %s74
      %p81 = scmp.eq.s32.totalorder %s29, 3
      %p82 = por %p80, %p81
      %p83 = scmp.ne.s32.totalorder %s74, %s75
      %p84 = scmp.eq.s32.totalorder %s29, 0
      %p85 = por %p83, %p84
      %p86 = scmp.ne.s32.totalorder %s74, %s75
      %p87 = scmp.eq.s32.totalorder %s30, 3
      %p88 = por %p86, %p87
      %p90 = scmp.ne.s32.totalorder %s75, %s89
      %p91 = scmp.eq.s32.totalorder %s30, 0
      %p92 = por %p90, %p91
      %s93 = ssub.s32 %s31, %s43
      %p94 = scmp.eq.s32.totalorder %s93, 0
      %s96 = sadd.s32 %s95, 1
      %s97 = scalar_select %p94, %s95, %s96
      %p100 = pneg %p94
      %p101 = scmp.eq.s32.totalorder %s24, 3
      %p102 = por %p100, %p101
      %p103 = scmp.ne.s32.totalorder %s95, %s98
      %p104 = scmp.eq.s32.totalorder %s24, 0
      %p105 = por %p103, %p104
      %p106 = scmp.ne.s32.totalorder %s95, %s98
      %p107 = scmp.eq.s32.totalorder %s29, 3
      %p108 = por %p106, %p107
      %p109 = scmp.ne.s32.totalorder %s98, %s99
      %p110 = scmp.eq.s32.totalorder %s29, 0
      %p111 = por %p109, %p110
      %p112 = scmp.ne.s32.totalorder %s98, %s99
      %p113 = scmp.eq.s32.totalorder %s30, 3
      %p114 = por %p112, %p113
      %p116 = scmp.ne.s32.totalorder %s99, %s115
      %p117 = scmp.eq.s32.totalorder %s30, 0
      %p118 = por %p116, %p117
      %s120 = sadd.s32 %s119, 1
      %p123 = scmp.eq.s32.totalorder %s24, 3
      %p124 = scmp.ne.s32.totalorder %s119, %s121
      %p125 = scmp.eq.s32.totalorder %s24, 0
      %p126 = por %p124, %p125
      %p127 = scmp.ne.s32.totalorder %s119, %s121
      %p128 = scmp.eq.s32.totalorder %s29, 3
      %p129 = por %p127, %p128
      %p130 = scmp.ne.s32.totalorder %s121, %s122
      %p131 = scmp.eq.s32.totalorder %s29, 0
      %p132 = por %p130, %p131
      %p133 = scmp.ne.s32.totalorder %s121, %s122
      %p134 = scmp.eq.s32.totalorder %s30, 3
      %p135 = por %p133, %p134
      %p137 = scmp.ne.s32.totalorder %s122, %s136
      %p138 = scmp.eq.s32.totalorder %s30, 0
      %p139 = por %p137, %p138
      %s141 = sadd.s32 %s140, 1
      %p144 = scmp.eq.s32.totalorder %s24, 3
      %p145 = scmp.ne.s32.totalorder %s140, %s142
      %p146 = scmp.eq.s32.totalorder %s24, 0
      %p147 = por %p145, %p146
      %p148 = scmp.ne.s32.totalorder %s140, %s142
      %p149 = scmp.eq.s32.totalorder %s29, 3
      %p150 = por %p148, %p149
      %p151 = scmp.ne.s32.totalorder %s142, %s143
      %p152 = scmp.eq.s32.totalorder %s29, 0
      %p153 = por %p151, %p152
      %p154 = scmp.ne.s32.totalorder %s142, %s143
      %p155 = scmp.eq.s32.totalorder %s30, 3
      %p156 = por %p154, %p155
      %p158 = scmp.ne.s32.totalorder %s143, %s157
      %p159 = scmp.eq.s32.totalorder %s30, 0
      %p160 = por %p158, %p159
      %s162 = sadd.s32 %s161, 1
      %p165 = scmp.eq.s32.totalorder %s24, 3
      %p166 = scmp.ne.s32.totalorder %s161, %s163
      %p167 = scmp.eq.s32.totalorder %s24, 0
      %p168 = por %p166, %p167
      %p169 = scmp.ne.s32.totalorder %s161, %s163
      %p170 = scmp.eq.s32.totalorder %s29, 3
      %p171 = por %p169, %p170
      %p172 = scmp.ne.s32.totalorder %s163, %s164
      %p173 = scmp.eq.s32.totalorder %s29, 0
      %p174 = por %p172, %p173
      %p175 = scmp.ne.s32.totalorder %s163, %s164
      %p176 = scmp.eq.s32.totalorder %s30, 3
      %p177 = por %p175, %p176
      %p179 = scmp.ne.s32.totalorder %s164, %s178
      %p180 = scmp.eq.s32.totalorder %s30, 0
      %p181 = por %p179, %p180
      %s183 = sadd.s32 %s182, 1
      %p186 = scmp.eq.s32.totalorder %s24, 3
      %p187 = scmp.ne.s32.totalorder %s182, %s184
      %p188 = scmp.eq.s32.totalorder %s24, 0
      %p189 = por %p187, %p188
      %p190 = scmp.ne.s32.totalorder %s182, %s184
      %p191 = scmp.eq.s32.totalorder %s29, 3
      %p192 = por %p190, %p191
      %p193 = scmp.ne.s32.totalorder %s184, %s185
      %p194 = scmp.eq.s32.totalorder %s29, 0
      %p195 = por %p193, %p194
      %p196 = scmp.ne.s32.totalorder %s184, %s185
      %p197 = scmp.eq.s32.totalorder %s30, 3
      %p198 = por %p196, %p197
      %p200 = scmp.ne.s32.totalorder %s185, %s199
      %p201 = scmp.eq.s32.totalorder %s30, 0
      %p202 = por %p200, %p201
      %s204 = sadd.s32 %s203, 1
      %p207 = scmp.eq.s32.totalorder %s24, 3
      %p208 = scmp.ne.s32.totalorder %s203, %s205
      %p209 = scmp.eq.s32.totalorder %s24, 0
      %p210 = por %p208, %p209
      %p211 = scmp.ne.s32.totalorder %s203, %s205
      %p212 = scmp.eq.s32.totalorder %s29, 3
      %p213 = por %p211, %p212
      %p214 = scmp.ne.s32.totalorder %s205, %s206
      %p215 = scmp.eq.s32.totalorder %s29, 0
      %p216 = por %p214, %p215
      %p217 = scmp.ne.s32.totalorder %s205, %s206
      %p218 = scmp.eq.s32.totalorder %s30, 3
      %p219 = por %p217, %p218
      %p221 = scmp.ne.s32.totalorder %s206, %s220
      %p222 = scmp.eq.s32.totalorder %s30, 0
      %p223 = por %p221, %p222
      %s225 = sadd.s32 %s224, 1
      %p228 = scmp.eq.s32.totalorder %s24, 3
      %p229 = scmp.ne.s32.totalorder %s224, %s226
      %p230 = scmp.eq.s32.totalorder %s24, 0
      %p231 = por %p229, %p230
      %p232 = scmp.ne.s32.totalorder %s224, %s226
      %p233 = scmp.eq.s32.totalorder %s29, 3
      %p234 = por %p232, %p233
      %p235 = scmp.ne.s32.totalorder %s226, %s227
      %p236 = scmp.eq.s32.totalorder %s29, 0
      %p237 = por %p235, %p236
      %p238 = scmp.ne.s32.totalorder %s226, %s227
      %p239 = scmp.eq.s32.totalorder %s30, 3
      %p240 = por %p238, %p239
      %p242 = scmp.ne.s32.totalorder %s227, %s241
      %p243 = scmp.eq.s32.totalorder %s30, 0
      %p244 = por %p242, %p243
      %s246 = sadd.s32 %s245, 1
      %p249 = scmp.eq.s32.totalorder %s24, 3
      %p250 = scmp.ne.s32.totalorder %s245, %s247
      %p251 = scmp.eq.s32.totalorder %s24, 0
      %p252 = por %p250, %p251
      %p253 = scmp.ne.s32.totalorder %s245, %s247
      %p254 = scmp.eq.s32.totalorder %s29, 3
      %p255 = por %p253, %p254
      %p256 = scmp.ne.s32.totalorder %s247, %s248
      %p257 = scmp.eq.s32.totalorder %s29, 0
      %p258 = por %p256, %p257
      %p259 = scmp.ne.s32.totalorder %s247, %s248
      %p260 = scmp.eq.s32.totalorder %s30, 3
      %p261 = por %p259, %p260
      %p263 = scmp.ne.s32.totalorder %s248, %s262
      %p264 = scmp.eq.s32.totalorder %s30, 0
      %p265 = por %p263, %p264
      %s266 = ssub.s32 %s31, %s43
      %p267 = scmp.eq.s32.totalorder %s266, 0
      %s269 = sadd.s32 %s268, 1
      %s270 = scalar_select %p267, %s268, %s269
      %p273 = pneg %p267
      %p274 = scmp.eq.s32.totalorder %s24, 3
      %p275 = por %p273, %p274
      %p276 = scmp.ne.s32.totalorder %s268, %s271
      %p277 = scmp.eq.s32.totalorder %s24, 0
      %p278 = por %p276, %p277
      %p279 = scmp.ne.s32.totalorder %s268, %s271
      %p280 = scmp.eq.s32.totalorder %s29, 3
      %p281 = por %p279, %p280
      %p282 = scmp.ne.s32.totalorder %s271, %s272
      %p283 = scmp.eq.s32.totalorder %s29, 0
      %p284 = por %p282, %p283
      %p285 = scmp.ne.s32.totalorder %s271, %s272
      %p286 = scmp.eq.s32.totalorder %s30, 3
      %p287 = por %p285, %p286
      %p289 = scmp.ne.s32.totalorder %s272, %s288
      %p290 = scmp.eq.s32.totalorder %s30, 0
      %p291 = por %p289, %p290
      %p292 = scmp.le.s32.totalorder 1, %s24
      %p293 = scmp.lt.s32.totalorder %s24, 5
      %p294 = pnand %p292, %p293
      %p295 = pneg %p294
      // Predicated region
      $region9: #{tpu_custom_call.1} parent=5 // pred_check
        _
      $region10: #{tpu_custom_call.1} parent=5 // pred_check_branch
        %297 = sbr.rel (%p294) target = $region12
      $region11: #{tpu_custom_call.1} parent=5 // pred_region
        %s298 = ssub.s32 %s24, 1
        // Predicated region
        $region13: #{tpu_custom_call.1} parent=11 // pred_check
          %p299 = pneg %p85
        $region14: #{tpu_custom_call.1} parent=11 // pred_check_branch
          %301 = sbr.rel (%p299) target = $region16
        $region15: #{tpu_custom_call.1} parent=11 // pred_region
          %s303 = ssub.s32 2048, 2048
          %304 = vsyncadd [#allocation7], %s303
          %s305 = sshll.u32 [#allocation6], 4
          %s306 = int_to_ptr.vmem [resolvable:$true] %s305
          %311 = dma.hbm_to_vmem [thread:$0]  %s1, 2048, %s306, [#allocation7], 64, 64, 4
        $region16: #{tpu_custom_call.1} parent=11 // pred_fallthru
          _
        // Predicated region
        $region17: #{tpu_custom_call.1} parent=11 // pred_check
          %p312 = pneg %p132
        $region18: #{tpu_custom_call.1} parent=11 // pred_check_branch
          %314 = sbr.rel (%p312) target = $region20
        $region19: #{tpu_custom_call.1} parent=11 // pred_region
          _
        $region20: #{tpu_custom_call.1} parent=11 // pred_fallthru
          _
        // Predicated region
        $region21: #{tpu_custom_call.1} parent=11 // pred_check
          %p315 = pneg %p153
        $region22: #{tpu_custom_call.1} parent=11 // pred_check_branch
          %317 = sbr.rel (%p315) target = $region24
        $region23: #{tpu_custom_call.1} parent=11 // pred_region
          %s319 = ssub.s32 1024, 1024
          %320 = vsyncadd [#allocation7], %s319
          %s321 = sshll.u32 [#allocation9], 4
          %s322 = int_to_ptr.vmem [resolvable:$true] %s321
          %327 = dma.hbm_to_vmem [thread:$0]  %s4, 1024, %s322, [#allocation7], 64, 64, 4
        $region24: #{tpu_custom_call.1} parent=11 // pred_fallthru
          _
        // Predicated region
        $region25: #{tpu_custom_call.1} parent=11 // pred_check
          %p328 = pneg %p174
        $region26: #{tpu_custom_call.1} parent=11 // pred_check_branch
          %330 = sbr.rel (%p328) target = $region28
        $region27: #{tpu_custom_call.1} parent=11 // pred_region
          _
        $region28: #{tpu_custom_call.1} parent=11 // pred_fallthru
          _
        // Predicated region
        $region29: #{tpu_custom_call.1} parent=11 // pred_check
          %p331 = pneg %p195
        $region30: #{tpu_custom_call.1} parent=11 // pred_check_branch
          %333 = sbr.rel (%p331) target = $region32
        $region31: #{tpu_custom_call.1} parent=11 // pred_region
          %s335 = ssub.s32 1024, 1024
          %336 = vsyncadd [#allocation11], %s335
          %s337 = sshll.u32 [#allocation10], 4
          %s338 = int_to_ptr.vmem [resolvable:$true] %s337
          %343 = dma.hbm_to_vmem [thread:$0]  %s6, 1024, %s338, [#allocation11], 64, 64, 4
        $region32: #{tpu_custom_call.1} parent=11 // pred_fallthru
          _
        // Predicated region
        $region33: #{tpu_custom_call.1} parent=11 // pred_check
          %p344 = pneg %p216
        $region34: #{tpu_custom_call.1} parent=11 // pred_check_branch
          %346 = sbr.rel (%p344) target = $region36
        $region35: #{tpu_custom_call.1} parent=11 // pred_region
          _
        $region36: #{tpu_custom_call.1} parent=11 // pred_fallthru
          _
        // Predicated region
        $region37: #{tpu_custom_call.1} parent=11 // pred_check
          %p347 = pneg %p237
        $region38: #{tpu_custom_call.1} parent=11 // pred_check_branch
          %349 = sbr.rel (%p347) target = $region40
        $region39: #{tpu_custom_call.1} parent=11 // pred_region
          %s351 = ssub.s32 1024, 1024
          %352 = vsyncadd [#allocation11], %s351
          %s353 = sshll.u32 [#allocation12], 4
          %s354 = int_to_ptr.vmem [resolvable:$true] %s353
          %359 = dma.hbm_to_vmem [thread:$0]  %s8, 1024, %s354, [#allocation11], 64, 64, 4
        $region40: #{tpu_custom_call.1} parent=11 // pred_fallthru
          _
        // Predicated region
        $region41: #{tpu_custom_call.1} parent=11 // pred_check
          %p360 = pneg %p258
        $region42: #{tpu_custom_call.1} parent=11 // pred_check_branch
          %362 = sbr.rel (%p360) target = $region44
        $region43: #{tpu_custom_call.1} parent=11 // pred_region
          _
        $region44: #{tpu_custom_call.1} parent=11 // pred_fallthru
          _
      $region12: #{tpu_custom_call.1} parent=5 // pred_fallthru
        _
      %p363 = scmp.lt.s32.totalorder %s24, 4
      // Predicated region
      $region45: #{tpu_custom_call.1} parent=5 // pred_check
        %p364 = pneg %p363
      $region46: #{tpu_custom_call.1} parent=5 // pred_check_branch
        %366 = sbr.rel (%p364) target = $region48
      $region47: #{tpu_custom_call.1} parent=5 // pred_region
        // Predicated region
        $region49: #{tpu_custom_call.1} parent=47 // pred_check
          %p367 = pneg %p58
        $region50: #{tpu_custom_call.1} parent=47 // pred_check_branch
          %369 = sbr.rel (%p367) target = $region52
        $region51: #{tpu_custom_call.1} parent=47 // pred_region
          %s370 = sand.u32 %s24, 1
          %s371 = scalar_lea.sflag [#allocation4], %s370
          %s372 = sand.u32 %s48, 1
          %s373 = smul.addr %s372, 32
          %s374 = scalar_lea.vmem [#allocation3], %s373
          %s375 = smul.u32 4, %s31
          %s377 = ssub.s32 512, 512
          %378 = vsyncadd %s371, %s377
          %s379 = smul.addr %s375, 2
          %s380 = sadd.s32 %s32, %s379
          %s381 = smul.addr %s380, 128
          %s382 = scalar_lea.hbm %s0, %s381
          %s383 = sshll.u32 %s374, 4
          %s384 = int_to_ptr.vmem [resolvable:$true] %s383
          %389 = dma.hbm_to_vmem [thread:$0]  %s382, 512, %s384, %s371, 256, 128, 8
        $region52: #{tpu_custom_call.1} parent=47 // pred_fallthru
          _
        // Predicated region
        $region53: #{tpu_custom_call.1} parent=47 // pred_check
          %p390 = pneg %p105
        $region54: #{tpu_custom_call.1} parent=47 // pred_check_branch
          %392 = sbr.rel (%p390) target = $region56
        $region55: #{tpu_custom_call.1} parent=47 // pred_region
          %s393 = sand.u32 %s24, 1
          %s394 = scalar_lea.sflag [#allocation4], %s393
          %s395 = sand.u32 %s95, 1
          %s396 = smul.addr %s395, 128
          %s397 = scalar_lea.vmem [#allocation8], %s396
          %s398 = smul.u32 16, %s31
          %s400 = ssub.s32 2048, 2048
          %401 = vsyncadd %s394, %s400
          %s402 = smul.addr %s398, 128
          %s403 = scalar_lea.hbm %s2, %s402
          %s404 = sshll.u32 %s397, 4
          %s405 = int_to_ptr.vmem [resolvable:$true] %s404
          %410 = dma.hbm_to_vmem [thread:$0]  %s403, 2048, %s405, %s394, 128, 128, 8
        $region56: #{tpu_custom_call.1} parent=47 // pred_fallthru
          _
      $region48: #{tpu_custom_call.1} parent=5 // pred_fallthru
        _
      %p411 = scmp.le.s32.totalorder 1, %s24
      %p412 = scmp.lt.s32.totalorder %s24, 5
      %p413 = pnand %p411, %p412
      %p414 = pneg %p413
      // Predicated region
      $region57: #{tpu_custom_call.1} parent=5 // pred_check
        _
      $region58: #{tpu_custom_call.1} parent=5 // pred_check_branch
        %416 = sbr.rel (%p413) target = $region60
      $region59: #{tpu_custom_call.1} parent=5 // pred_region
        %s417 = ssub.s32 %s24, 1
        %s418 = sand.u32 %s29, 1
        %s419 = scalar_lea.sflag [#allocation4], %s418
        %s420 = sand.u32 %s51, 1
        %s421 = smul.addr %s420, 32
        %s422 = scalar_lea.vmem [#allocation3], %s421
        // Predicated region
        $region61: #{tpu_custom_call.1} parent=59 // pred_check
          %p423 = pneg %p64
        $region62: #{tpu_custom_call.1} parent=59 // pred_check_branch
          %425 = sbr.rel (%p423) target = $region64
        $region63: #{tpu_custom_call.1} parent=59 // pred_region
          %426 = dma.done %s419, 512
        $region64: #{tpu_custom_call.1} parent=59 // pred_fallthru
          _
        // Predicated region
        $region65: #{tpu_custom_call.1} parent=59 // pred_check
          %p427 = pneg %p85
        $region66: #{tpu_custom_call.1} parent=59 // pred_check_branch
          %429 = sbr.rel (%p427) target = $region68
        $region67: #{tpu_custom_call.1} parent=59 // pred_region
          %430 = dma.done [#allocation7], 2048
        $region68: #{tpu_custom_call.1} parent=59 // pred_fallthru
          _
        %s431 = sand.u32 %s29, 1
        %s432 = scalar_lea.sflag [#allocation4], %s431
        %s433 = sand.u32 %s98, 1
        %s434 = smul.addr %s433, 128
        %s435 = scalar_lea.vmem [#allocation8], %s434
        // Predicated region
        $region69: #{tpu_custom_call.1} parent=59 // pred_check
          %p436 = pneg %p111
        $region70: #{tpu_custom_call.1} parent=59 // pred_check_branch
          %438 = sbr.rel (%p436) target = $region72
        $region71: #{tpu_custom_call.1} parent=59 // pred_region
          %439 = dma.done %s432, 2048
        $region72: #{tpu_custom_call.1} parent=59 // pred_fallthru
          _
        // Predicated region
        $region73: #{tpu_custom_call.1} parent=59 // pred_check
          %p440 = pneg %p153
        $region74: #{tpu_custom_call.1} parent=59 // pred_check_branch
          %442 = sbr.rel (%p440) target = $region76
        $region75: #{tpu_custom_call.1} parent=59 // pred_region
          %443 = dma.done [#allocation7], 1024
        $region76: #{tpu_custom_call.1} parent=59 // pred_fallthru
          _
        // Predicated region
        $region77: #{tpu_custom_call.1} parent=59 // pred_check
          %p444 = pneg %p195
        $region78: #{tpu_custom_call.1} parent=59 // pred_check_branch
          %446 = sbr.rel (%p444) target = $region80
        $region79: #{tpu_custom_call.1} parent=59 // pred_region
          %447 = dma.done [#allocation11], 1024
        $region80: #{tpu_custom_call.1} parent=59 // pred_fallthru
          _
        // Predicated region
        $region81: #{tpu_custom_call.1} parent=59 // pred_check
          %p448 = pneg %p237
        $region82: #{tpu_custom_call.1} parent=59 // pred_check_branch
          %450 = sbr.rel (%p448) target = $region84
        $region83: #{tpu_custom_call.1} parent=59 // pred_region
          %451 = dma.done [#allocation11], 1024
        $region84: #{tpu_custom_call.1} parent=59 // pred_fallthru
          _
        %s452 = sand.u32 %s29, 1
        %s453 = scalar_lea.sflag [#allocation4], %s452
        %s454 = sand.u32 %s51, 1
        %s455 = smul.addr %s454, 32
        %s456 = scalar_lea.vmem [#allocation3], %s455
        %p457 = pneg %p64
        %p458 = pneg %p61
        %p459 = pneg %p85
        %p460 = pneg %p82
        %s461 = sand.u32 %s29, 1
        %s462 = scalar_lea.sflag [#allocation4], %s461
        %s463 = sand.u32 %s98, 1
        %s464 = smul.addr %s463, 128
        %s465 = scalar_lea.vmem [#allocation8], %s464
        %p466 = pneg %p111
        %p467 = pneg %p108
        %p468 = pneg %p132
        %p469 = pneg %p129
        %p470 = pneg %p153
        %p471 = pneg %p150
        %p472 = pneg %p174
        %p473 = pneg %p171
        %p474 = pneg %p195
        %p475 = pneg %p192
        %p476 = pneg %p216
        %p477 = pneg %p213
        %p478 = pneg %p237
        %p479 = pneg %p234
        %p480 = pneg %p258
        %p481 = pneg %p255
        %p482 = pneg %p284
        %p483 = pneg %p281
        %s484 = sand.u32 %s271, 1
        %s485 = scalar_lea.sflag [#allocation5], %s484
        %s486 = sand.u32 %s271, 1
        %s487 = smul.addr %s486, 128
        %s488 = scalar_lea.vmem [#allocation13], %s487
        %s489 = smul.u32 4, %s33
        %s490 = smul.u32 16, %s33
        %s491 = smul.u32 16, %s33
        %p493 = scmp.eq.s32.totalorder %s34, 0
        // Predicated region
        $region85: #{tpu_custom_call.1} parent=59 // pred_check
          %p494 = pneg %p493
        $region86: #{tpu_custom_call.1} parent=59 // pred_check_branch
          %496 = sbr.rel (%p494) target = $region88
        $region87: #{tpu_custom_call.1} parent=59 // pred_region
          %497 = vst [vmem:[#allocation2] sm:$0xff] 0.0
          %498 = vst [vmem:[#allocation2 + $0x8] sm:$0xff] 0.0
          %499 = vst [vmem:[#allocation2 + $0x10] sm:$0xff] 0.0
          %500 = vst [vmem:[#allocation2 + $0x18] sm:$0xff] 0.0
          %501 = vst [vmem:[#allocation2 + $0x20] sm:$0xff] 0.0
          %502 = vst [vmem:[#allocation2 + $0x28] sm:$0xff] 0.0
          %503 = vst [vmem:[#allocation2 + $0x30] sm:$0xff] 0.0
          %504 = vst [vmem:[#allocation2 + $0x38] sm:$0xff] 0.0
          %505 = vst [vmem:[#allocation2 + $0x40] sm:$0xff] 0.0
          %506 = vst [vmem:[#allocation2 + $0x48] sm:$0xff] 0.0
          %507 = vst [vmem:[#allocation2 + $0x50] sm:$0xff] 0.0
          %508 = vst [vmem:[#allocation2 + $0x58] sm:$0xff] 0.0
          %509 = vst [vmem:[#allocation2 + $0x60] sm:$0xff] 0.0
          %510 = vst [vmem:[#allocation2 + $0x68] sm:$0xff] 0.0
          %511 = vst [vmem:[#allocation2 + $0x70] sm:$0xff] 0.0
          %512 = vst [vmem:[#allocation2 + $0x78] sm:$0xff] 0.0
        $region88: #{tpu_custom_call.1} parent=59 // pred_fallthru
          _
        %v513 = vld [vmem:[%s422] sm:$0xff]
        %v514 = vld [vmem:[%s422 + $0x8] sm:$0xff]
        %v515 = vld [vmem:[%s422 + $0x10] sm:$0xff]
        %v516 = vld [vmem:[%s422 + $0x18] sm:$0xff]
        %v517 = vunpack.c.l.s8.bf16 %v513
        %v518 = vunpack.c.h.s8.bf16 %v513
        %v519 = vunpack.c.l.s8.bf16 %v514
        %v520 = vunpack.c.h.s8.bf16 %v514
        %v521 = vunpack.c.l.s8.bf16 %v515
        %v522 = vunpack.c.h.s8.bf16 %v515
        %v523 = vunpack.c.l.s8.bf16 %v516
        %v524 = vunpack.c.h.s8.bf16 %v516
        %s525 = smul.u32 %s34, 128
        %s526 = sshra.s32 %s525, 3
        %s527 = sand.u32 %s525, 7
        %s528 = smul.addr %s526, 4
        %s529 = scalar_lea.vmem [#allocation6], %s528
        %v530 = vld [vmem:[%s529] sm:$0xf]
        %v531 = vld [vmem:[%s529 + $0x4] sm:$0xf]
        %v532 = vld [vmem:[%s529 + $0x8] sm:$0xf]
        %v533 = vld [vmem:[%s529 + $0xc] sm:$0xf]
        %v534 = vld [vmem:[%s529 + $0x10] sm:$0xf]
        %v535 = vld [vmem:[%s529 + $0x14] sm:$0xf]
        %v536 = vld [vmem:[%s529 + $0x18] sm:$0xf]
        %v537 = vld [vmem:[%s529 + $0x1c] sm:$0xf]
        %v538 = vld [vmem:[%s529 + $0x20] sm:$0xf]
        %v539 = vld [vmem:[%s529 + $0x24] sm:$0xf]
        %v540 = vld [vmem:[%s529 + $0x28] sm:$0xf]
        %v541 = vld [vmem:[%s529 + $0x2c] sm:$0xf]
        %v542 = vld [vmem:[%s529 + $0x30] sm:$0xf]
        %v543 = vld [vmem:[%s529 + $0x34] sm:$0xf]
        %v544 = vld [vmem:[%s529 + $0x38] sm:$0xf]
        %v545 = vld [vmem:[%s529 + $0x3c] sm:$0xf]
        %v546 = vld [vmem:[#allocation2] sm:$0xff]
        %v547 = vld [vmem:[#allocation2 + $0x8] sm:$0xff]
        %v548 = vld [vmem:[#allocation2 + $0x10] sm:$0xff]
        %v549 = vld [vmem:[#allocation2 + $0x18] sm:$0xff]
        %v550 = vld [vmem:[#allocation2 + $0x20] sm:$0xff]
        %v551 = vld [vmem:[#allocation2 + $0x28] sm:$0xff]
        %v552 = vld [vmem:[#allocation2 + $0x30] sm:$0xff]
        %v553 = vld [vmem:[#allocation2 + $0x38] sm:$0xff]
        %v554 = vld [vmem:[#allocation2 + $0x40] sm:$0xff]
        %v555 = vld [vmem:[#allocation2 + $0x48] sm:$0xff]
        %v556 = vld [vmem:[#allocation2 + $0x50] sm:$0xff]
        %v557 = vld [vmem:[#allocation2 + $0x58] sm:$0xff]
        %v558 = vld [vmem:[#allocation2 + $0x60] sm:$0xff]
        %v559 = vld [vmem:[#allocation2 + $0x68] sm:$0xff]
        %v560 = vld [vmem:[#allocation2 + $0x70] sm:$0xff]
        %v561 = vld [vmem:[#allocation2 + $0x78] sm:$0xff]
        %v578 = vunpack.c.l.b16 %v530
        %v579 = vunpack.c.l.b16 %v531
        %v580 = vunpack.c.l.b16 %v532
        %v581 = vunpack.c.l.b16 %v533
        %v582 = vunpack.c.l.b16 %v534
        %v583 = vunpack.c.l.b16 %v535
        %v584 = vunpack.c.l.b16 %v536
        %v585 = vunpack.c.l.b16 %v537
        %v586 = vunpack.c.l.b16 %v538
        %v587 = vunpack.c.l.b16 %v539
        %v588 = vunpack.c.l.b16 %v540
        %v589 = vunpack.c.l.b16 %v541
        %v590 = vunpack.c.l.b16 %v542
        %v591 = vunpack.c.l.b16 %v543
        %v592 = vunpack.c.l.b16 %v544
        %v593 = vunpack.c.l.b16 %v545
        %v594 = vpack.c.b16 %v579, %v578
        %v595 = vpack.c.b16 %v581, %v580
        %v596 = vpack.c.b16 %v583, %v582
        %v597 = vpack.c.b16 %v585, %v584
        %v598 = vpack.c.b16 %v587, %v586
        %v599 = vpack.c.b16 %v589, %v588
        %v600 = vpack.c.b16 %v591, %v590
        %v601 = vpack.c.b16 %v593, %v592
        %610 = vmatprep.subr.bf16.mxu0 0
        %611 = vmatpush1.bf16.msra.mxu0 %v594
        %612 = vmatprep.subr.bf16.mxu0 0
        %613 = vmatpush1.bf16.msra.mxu0 %v595
        %614 = vmatprep.subr.bf16.mxu0 0
        %615 = vmatpush1.bf16.msra.mxu0 %v596
        %616 = vmatprep.subr.bf16.mxu0 0
        %617 = vmatpush1.bf16.msra.mxu0 %v597
        %618 = vmatprep.subr.bf16.mxu0 0
        %619 = vmatpush1.bf16.msra.mxu0 %v598
        %620 = vmatprep.subr.bf16.mxu0 0
        %621 = vmatpush1.bf16.msra.mxu0 %v599
        %622 = vmatprep.subr.bf16.mxu0 0
        %623 = vmatpush1.bf16.msra.mxu0 %v600
        %624 = vmatprep.subr.bf16.mxu0 0
        %625 = vmatpush1.bf16.msra.mxu0 %v601
        %626 = vmatprep.subr.bf16.mxu0 0
        %627 = vmatpush1.bf16.msra.mxu0 0
        %628 = vmatprep.subr.bf16.mxu0 0
        %629 = vmatpush1.bf16.msra.mxu0 0
        %630 = vmatprep.subr.bf16.mxu0 0
        %631 = vmatpush1.bf16.msra.mxu0 0
        %632 = vmatprep.subr.bf16.mxu0 0
        %633 = vmatpush1.bf16.msra.mxu0 0
        %634 = vmatprep.subr.bf16.mxu0 0
        %635 = vmatpush1.bf16.msra.mxu0 0
        %636 = vmatprep.subr.bf16.mxu0 0
        %637 = vmatpush1.bf16.msra.mxu0 0
        %638 = vmatprep.subr.bf16.mxu0 0
        %639 = vmatpush1.bf16.msra.mxu0 0
        %640 = vmatprep.subr.bf16.mxu0 0
        %641 = vmatpush1.bf16.msra.mxu0 0
        %642 = vmatprep.mubr.bf16.mxu0 0
        %643 = vmatmul.mubr.bf16.gmra.mrb[0].mxu0 %v517
        %v644 = vpop.f32.mrb[0].mxu0
        %v645 = vadd.f32 0.0, %v644
        %v646 = vpop.f32.mrb[0].mxu0
        %v647 = vpop.f32.mrb[0].mxu0
        %v648 = vadd.f32 0.0, %v647
        %v649 = vpop.f32.mrb[0].mxu0
        %650 = vmatprep.mubr.bf16.mxu0 0
        %651 = vmatmul.mubr.bf16.gmra.mrb[0].mxu0 %v518
        %v652 = vpop.f32.mrb[0].mxu0
        %v653 = vadd.f32 0.0, %v652
        %v654 = vpop.f32.mrb[0].mxu0
        %v655 = vpop.f32.mrb[0].mxu0
        %v656 = vadd.f32 0.0, %v655
        %v657 = vpop.f32.mrb[0].mxu0
        %658 = vmatprep.mubr.bf16.mxu0 0
        %659 = vmatmul.mubr.bf16.gmra.mrb[0].mxu0 %v519
        %v660 = vpop.f32.mrb[0].mxu0
        %v661 = vadd.f32 0.0, %v660
        %v662 = vpop.f32.mrb[0].mxu0
        %v663 = vpop.f32.mrb[0].mxu0
        %v664 = vadd.f32 0.0, %v663
        %v665 = vpop.f32.mrb[0].mxu0
        %666 = vmatprep.mubr.bf16.mxu0 0
        %667 = vmatmul.mubr.bf16.gmra.mrb[0].mxu0 %v520
        %v668 = vpop.f32.mrb[0].mxu0
        %v669 = vadd.f32 0.0, %v668
        %v670 = vpop.f32.mrb[0].mxu0
        %v671 = vpop.f32.mrb[0].mxu0
        %v672 = vadd.f32 0.0, %v671
        %v673 = vpop.f32.mrb[0].mxu0
        %674 = vmatprep.mubr.bf16.mxu0 0
        %675 = vmatmul.mubr.bf16.gmra.mrb[0].mxu0 %v521
        %v676 = vpop.f32.mrb[0].mxu0
        %v677 = vadd.f32 0.0, %v676
        %v678 = vpop.f32.mrb[0].mxu0
        %v679 = vpop.f32.mrb[0].mxu0
        %v680 = vadd.f32 0.0, %v679
        %v681 = vpop.f32.mrb[0].mxu0
        %682 = vmatprep.mubr.bf16.mxu0 0
        %683 = vmatmul.mubr.bf16.gmra.mrb[0].mxu0 %v522
        %v684 = vpop.f32.mrb[0].mxu0
        %v685 = vadd.f32 0.0, %v684
        %v686 = vpop.f32.mrb[0].mxu0
        %v687 = vpop.f32.mrb[0].mxu0
        %v688 = vadd.f32 0.0, %v687
        %v689 = vpop.f32.mrb[0].mxu0
        %690 = vmatprep.mubr.bf16.mxu0 0
        %691 = vmatmul.mubr.bf16.gmra.mrb[0].mxu0 %v523
        %v692 = vpop.f32.mrb[0].mxu0
        %v693 = vadd.f32 0.0, %v692
        %v694 = vpop.f32.mrb[0].mxu0
        %v695 = vpop.f32.mrb[0].mxu0
        %v696 = vadd.f32 0.0, %v695
        %v697 = vpop.f32.mrb[0].mxu0
        %698 = vmatprep.mubr.bf16.mxu0 0
        %699 = vmatmul.mubr.bf16.gmra.mrb[0].mxu0 %v524
        %v700 = vpop.f32.mrb[0].mxu0
        %v701 = vadd.f32 0.0, %v700
        %v702 = vpop.f32.mrb[0].mxu0
        %v703 = vpop.f32.mrb[0].mxu0
        %v704 = vadd.f32 0.0, %v703
        %v705 = vpop.f32.mrb[0].mxu0
        %706 = vdwg.mxu0
        %v707 = vadd.f32 %v546, %v645
        %v708 = vadd.f32 %v547, %v648
        %v709 = vadd.f32 %v548, %v653
        %v710 = vadd.f32 %v549, %v656
        %v711 = vadd.f32 %v550, %v661
        %v712 = vadd.f32 %v551, %v664
        %v713 = vadd.f32 %v552, %v669
        %v714 = vadd.f32 %v553, %v672
        %v715 = vadd.f32 %v554, %v677
        %v716 = vadd.f32 %v555, %v680
        %v717 = vadd.f32 %v556, %v685
        %v718 = vadd.f32 %v557, %v688
        %v719 = vadd.f32 %v558, %v693
        %v720 = vadd.f32 %v559, %v696
        %v721 = vadd.f32 %v560, %v701
        %v722 = vadd.f32 %v561, %v704
        %723 = vst [vmem:[#allocation2] sm:$0xff] %v707
        %724 = vst [vmem:[#allocation2 + $0x8] sm:$0xff] %v708
        %725 = vst [vmem:[#allocation2 + $0x10] sm:$0xff] %v709
        %726 = vst [vmem:[#allocation2 + $0x18] sm:$0xff] %v710
        %727 = vst [vmem:[#allocation2 + $0x20] sm:$0xff] %v711
        %728 = vst [vmem:[#allocation2 + $0x28] sm:$0xff] %v712
        %729 = vst [vmem:[#allocation2 + $0x30] sm:$0xff] %v713
        %730 = vst [vmem:[#allocation2 + $0x38] sm:$0xff] %v714
        %731 = vst [vmem:[#allocation2 + $0x40] sm:$0xff] %v715
        %732 = vst [vmem:[#allocation2 + $0x48] sm:$0xff] %v716
        %733 = vst [vmem:[#allocation2 + $0x50] sm:$0xff] %v717
        %734 = vst [vmem:[#allocation2 + $0x58] sm:$0xff] %v718
        %735 = vst [vmem:[#allocation2 + $0x60] sm:$0xff] %v719
        %736 = vst [vmem:[#allocation2 + $0x68] sm:$0xff] %v720
        %737 = vst [vmem:[#allocation2 + $0x70] sm:$0xff] %v721
        %738 = vst [vmem:[#allocation2 + $0x78] sm:$0xff] %v722
        %p739 = scmp.eq.s32.totalorder %s34, 1
        // Predicated region
        $region89: #{tpu_custom_call.1} parent=59 // pred_check
          %p740 = pneg %p739
        $region90: #{tpu_custom_call.1} parent=59 // pred_check_branch
          %742 = sbr.rel (%p740) target = $region92
        $region91: #{tpu_custom_call.1} parent=59 // pred_region
          %v743 = vld [vmem:[#allocation2] sm:$0xff]
          %v744 = vld [vmem:[#allocation2 + $0x8] sm:$0xff]
          %v745 = vld [vmem:[#allocation2 + $0x10] sm:$0xff]
          %v746 = vld [vmem:[#allocation2 + $0x18] sm:$0xff]
          %v747 = vld [vmem:[#allocation2 + $0x20] sm:$0xff]
          %v748 = vld [vmem:[#allocation2 + $0x28] sm:$0xff]
          %v749 = vld [vmem:[#allocation2 + $0x30] sm:$0xff]
          %v750 = vld [vmem:[#allocation2 + $0x38] sm:$0xff]
          %v751 = vld [vmem:[#allocation2 + $0x40] sm:$0xff]
          %v752 = vld [vmem:[#allocation2 + $0x48] sm:$0xff]
          %v753 = vld [vmem:[#allocation2 + $0x50] sm:$0xff]
          %v754 = vld [vmem:[#allocation2 + $0x58] sm:$0xff]
          %v755 = vld [vmem:[#allocation2 + $0x60] sm:$0xff]
          %v756 = vld [vmem:[#allocation2 + $0x68] sm:$0xff]
          %v757 = vld [vmem:[#allocation2 + $0x70] sm:$0xff]
          %v758 = vld [vmem:[#allocation2 + $0x78] sm:$0xff]
          %v759 = vld [vmem:[%s3] sm:$0x1]
          %v761 = vlaneseq
          %v762 = vshrl.u32 %v761, 7
          %v763 = vsub.s32 0, %v762
          %v764 = vrot.slane %v759, %v763
          %v766 = vadd.f32 %v743, %v764
          %v767 = vadd.f32 %v744, %v764
          %v768 = vadd.f32 %v745, %v764
          %v769 = vadd.f32 %v746, %v764
          %v770 = vadd.f32 %v747, %v764
          %v771 = vadd.f32 %v748, %v764
          %v772 = vadd.f32 %v749, %v764
          %v773 = vadd.f32 %v750, %v764
          %v774 = vadd.f32 %v751, %v764
          %v775 = vadd.f32 %v752, %v764
          %v776 = vadd.f32 %v753, %v764
          %v777 = vadd.f32 %v754, %v764
          %v778 = vadd.f32 %v755, %v764
          %v779 = vadd.f32 %v756, %v764
          %v780 = vadd.f32 %v757, %v764
          %v781 = vadd.f32 %v758, %v764
          %v782 = vmax.f32 %v766, 0.0
          %v783 = vmax.f32 %v767, 0.0
          %v784 = vmax.f32 %v768, 0.0
          %v785 = vmax.f32 %v769, 0.0
          %v786 = vmax.f32 %v770, 0.0
          %v787 = vmax.f32 %v771, 0.0
          %v788 = vmax.f32 %v772, 0.0
          %v789 = vmax.f32 %v773, 0.0
          %v790 = vmax.f32 %v774, 0.0
          %v791 = vmax.f32 %v775, 0.0
          %v792 = vmax.f32 %v776, 0.0
          %v793 = vmax.f32 %v777, 0.0
          %v794 = vmax.f32 %v778, 0.0
          %v795 = vmax.f32 %v779, 0.0
          %v796 = vmax.f32 %v780, 0.0
          %v797 = vmax.f32 %v781, 0.0
          %v798 = vld [vmem:[#allocation9] sm:$0xf]
          %v799 = vld [vmem:[#allocation9 + $0x4] sm:$0xf]
          %v800 = vld [vmem:[#allocation9 + $0x8] sm:$0xf]
          %v801 = vld [vmem:[#allocation9 + $0xc] sm:$0xf]
          %v802 = vld [vmem:[#allocation9 + $0x10] sm:$0xf]
          %v803 = vld [vmem:[#allocation9 + $0x14] sm:$0xf]
          %v804 = vld [vmem:[#allocation9 + $0x18] sm:$0xf]
          %v805 = vld [vmem:[#allocation9 + $0x1c] sm:$0xf]
          %v806 = vld [vmem:[#allocation9 + $0x20] sm:$0xf]
          %v807 = vld [vmem:[#allocation9 + $0x24] sm:$0xf]
          %v808 = vld [vmem:[#allocation9 + $0x28] sm:$0xf]
          %v809 = vld [vmem:[#allocation9 + $0x2c] sm:$0xf]
          %v810 = vld [vmem:[#allocation9 + $0x30] sm:$0xf]
          %v811 = vld [vmem:[#allocation9 + $0x34] sm:$0xf]
          %v812 = vld [vmem:[#allocation9 + $0x38] sm:$0xf]
          %v813 = vld [vmem:[#allocation9 + $0x3c] sm:$0xf]
          %v814 = vld [vmem:[%s5] sm:$0x1]
          %v815 = vpack.c.bf16 %v783, %v782
          %v816 = vpack.c.bf16 %v785, %v784
          %v817 = vpack.c.bf16 %v787, %v786
          %v818 = vpack.c.bf16 %v789, %v788
          %v819 = vpack.c.bf16 %v791, %v790
          %v820 = vpack.c.bf16 %v793, %v792
          %v821 = vpack.c.bf16 %v795, %v794
          %v822 = vpack.c.bf16 %v797, %v796
          %v824 = vlaneseq
          %v825 = vshrl.u32 %v824, 7
          %v826 = vsub.s32 0, %v825
          %v827 = vrot.slane %v814, %v826
          %v845 = vunpack.c.l.b16 %v798
          %v846 = vunpack.c.l.b16 %v799
          %v847 = vunpack.c.l.b16 %v800
          %v848 = vunpack.c.l.b16 %v801
          %v849 = vunpack.c.l.b16 %v802
          %v850 = vunpack.c.l.b16 %v803
          %v851 = vunpack.c.l.b16 %v804
          %v852 = vunpack.c.l.b16 %v805
          %v853 = vunpack.c.l.b16 %v806
          %v854 = vunpack.c.l.b16 %v807
          %v855 = vunpack.c.l.b16 %v808
          %v856 = vunpack.c.l.b16 %v809
          %v857 = vunpack.c.l.b16 %v810
          %v858 = vunpack.c.l.b16 %v811
          %v859 = vunpack.c.l.b16 %v812
          %v860 = vunpack.c.l.b16 %v813
          %v861 = vpack.c.b16 %v846, %v845
          %v862 = vpack.c.b16 %v848, %v847
          %v863 = vpack.c.b16 %v850, %v849
          %v864 = vpack.c.b16 %v852, %v851
          %v865 = vpack.c.b16 %v854, %v853
          %v866 = vpack.c.b16 %v856, %v855
          %v867 = vpack.c.b16 %v858, %v857
          %v868 = vpack.c.b16 %v860, %v859
          %877 = vmatprep.subr.bf16.mxu0 0
          %878 = vmatpush1.bf16.msra.mxu0 %v861
          %879 = vmatprep.subr.bf16.mxu0 0
          %880 = vmatpush1.bf16.msra.mxu0 %v862
          %881 = vmatprep.subr.bf16.mxu0 0
          %882 = vmatpush1.bf16.msra.mxu0 %v863
          %883 = vmatprep.subr.bf16.mxu0 0
          %884 = vmatpush1.bf16.msra.mxu0 %v864
          %885 = vmatprep.subr.bf16.mxu0 0
          %886 = vmatpush1.bf16.msra.mxu0 %v865
          %887 = vmatprep.subr.bf16.mxu0 0
          %888 = vmatpush1.bf16.msra.mxu0 %v866
          %889 = vmatprep.subr.bf16.mxu0 0
          %890 = vmatpush1.bf16.msra.mxu0 %v867
          %891 = vmatprep.subr.bf16.mxu0 0
          %892 = vmatpush1.bf16.msra.mxu0 %v868
          %893 = vmatprep.subr.bf16.mxu0 0
          %894 = vmatpush1.bf16.msra.mxu0 0
          %895 = vmatprep.subr.bf16.mxu0 0
          %896 = vmatpush1.bf16.msra.mxu0 0
          %897 = vmatprep.subr.bf16.mxu0 0
          %898 = vmatpush1.bf16.msra.mxu0 0
          %899 = vmatprep.subr.bf16.mxu0 0
          %900 = vmatpush1.bf16.msra.mxu0 0
          %901 = vmatprep.subr.bf16.mxu0 0
          %902 = vmatpush1.bf16.msra.mxu0 0
          %903 = vmatprep.subr.bf16.mxu0 0
          %904 = vmatpush1.bf16.msra.mxu0 0
          %905 = vmatprep.subr.bf16.mxu0 0
          %906 = vmatpush1.bf16.msra.mxu0 0
          %907 = vmatprep.subr.bf16.mxu0 0
          %908 = vmatpush1.bf16.msra.mxu0 0
          %909 = vmatprep.mubr.bf16.mxu0 0
          %910 = vmatmul.mubr.bf16.gmra.mrb[0].mxu0 %v815
          %v911 = vpop.f32.mrb[0].mxu0
          %v912 = vadd.f32 %v827, %v911
          %v913 = vpop.f32.mrb[0].mxu0
          %v914 = vpop.f32.mrb[0].mxu0
          %v915 = vadd.f32 %v827, %v914
          %v916 = vpop.f32.mrb[0].mxu0
          %917 = vmatprep.mubr.bf16.mxu0 0
          %918 = vmatmul.mubr.bf16.gmra.mrb[0].mxu0 %v816
          %v919 = vpop.f32.mrb[0].mxu0
          %v920 = vadd.f32 %v827, %v919
          %v921 = vpop.f32.mrb[0].mxu0
          %v922 = vpop.f32.mrb[0].mxu0
          %v923 = vadd.f32 %v827, %v922
          %v924 = vpop.f32.mrb[0].mxu0
          %925 = vmatprep.mubr.bf16.mxu0 0
          %926 = vmatmul.mubr.bf16.gmra.mrb[0].mxu0 %v817
          %v927 = vpop.f32.mrb[0].mxu0
          %v928 = vadd.f32 %v827, %v927
          %v929 = vpop.f32.mrb[0].mxu0
          %v930 = vpop.f32.mrb[0].mxu0
          %v931 = vadd.f32 %v827, %v930
          %v932 = vpop.f32.mrb[0].mxu0
          %933 = vmatprep.mubr.bf16.mxu0 0
          %934 = vmatmul.mubr.bf16.gmra.mrb[0].mxu0 %v818
          %v935 = vpop.f32.mrb[0].mxu0
          %v936 = vadd.f32 %v827, %v935
          %v937 = vpop.f32.mrb[0].mxu0
          %v938 = vpop.f32.mrb[0].mxu0
          %v939 = vadd.f32 %v827, %v938
          %v940 = vpop.f32.mrb[0].mxu0
          %941 = vmatprep.mubr.bf16.mxu0 0
          %942 = vmatmul.mubr.bf16.gmra.mrb[0].mxu0 %v819
          %v943 = vpop.f32.mrb[0].mxu0
          %v944 = vadd.f32 %v827, %v943
          %v945 = vpop.f32.mrb[0].mxu0
          %v946 = vpop.f32.mrb[0].mxu0
          %v947 = vadd.f32 %v827, %v946
          %v948 = vpop.f32.mrb[0].mxu0
          %949 = vmatprep.mubr.bf16.mxu0 0
          %950 = vmatmul.mubr.bf16.gmra.mrb[0].mxu0 %v820
          %v951 = vpop.f32.mrb[0].mxu0
          %v952 = vadd.f32 %v827, %v951
          %v953 = vpop.f32.mrb[0].mxu0
          %v954 = vpop.f32.mrb[0].mxu0
          %v955 = vadd.f32 %v827, %v954
          %v956 = vpop.f32.mrb[0].mxu0
          %957 = vmatprep.mubr.bf16.mxu0 0
          %958 = vmatmul.mubr.bf16.gmra.mrb[0].mxu0 %v821
          %v959 = vpop.f32.mrb[0].mxu0
          %v960 = vadd.f32 %v827, %v959
          %v961 = vpop.f32.mrb[0].mxu0
          %v962 = vpop.f32.mrb[0].mxu0
          %v963 = vadd.f32 %v827, %v962
          %v964 = vpop.f32.mrb[0].mxu0
          %965 = vmatprep.mubr.bf16.mxu0 0
          %966 = vmatmul.mubr.bf16.gmra.mrb[0].mxu0 %v822
          %v967 = vpop.f32.mrb[0].mxu0
          %v968 = vadd.f32 %v827, %v967
          %v969 = vpop.f32.mrb[0].mxu0
          %v970 = vpop.f32.mrb[0].mxu0
          %v971 = vadd.f32 %v827, %v970
          %v972 = vpop.f32.mrb[0].mxu0
          %973 = vdwg.mxu0
          %v974 = vld [vmem:[%s435] sm:$0xff]
          %v975 = vld [vmem:[%s435 + $0x8] sm:$0xff]
          %v976 = vld [vmem:[%s435 + $0x10] sm:$0xff]
          %v977 = vld [vmem:[%s435 + $0x18] sm:$0xff]
          %v978 = vld [vmem:[%s435 + $0x20] sm:$0xff]
          %v979 = vld [vmem:[%s435 + $0x28] sm:$0xff]
          %v980 = vld [vmem:[%s435 + $0x30] sm:$0xff]
          %v981 = vld [vmem:[%s435 + $0x38] sm:$0xff]
          %v982 = vld [vmem:[%s435 + $0x40] sm:$0xff]
          %v983 = vld [vmem:[%s435 + $0x48] sm:$0xff]
          %v984 = vld [vmem:[%s435 + $0x50] sm:$0xff]
          %v985 = vld [vmem:[%s435 + $0x58] sm:$0xff]
          %v986 = vld [vmem:[%s435 + $0x60] sm:$0xff]
          %v987 = vld [vmem:[%s435 + $0x68] sm:$0xff]
          %v988 = vld [vmem:[%s435 + $0x70] sm:$0xff]
          %v989 = vld [vmem:[%s435 + $0x78] sm:$0xff]
          %v990 = vadd.f32 %v974, %v912
          %v991 = vadd.f32 %v975, %v915
          %v992 = vadd.f32 %v976, %v920
          %v993 = vadd.f32 %v977, %v923
          %v994 = vadd.f32 %v978, %v928
          %v995 = vadd.f32 %v979, %v931
          %v996 = vadd.f32 %v980, %v936
          %v997 = vadd.f32 %v981, %v939
          %v998 = vadd.f32 %v982, %v944
          %v999 = vadd.f32 %v983, %v947
          %v1000 = vadd.f32 %v984, %v952
          %v1001 = vadd.f32 %v985, %v955
          %v1002 = vadd.f32 %v986, %v960
          %v1003 = vadd.f32 %v987, %v963
          %v1004 = vadd.f32 %v988, %v968
          %v1005 = vadd.f32 %v989, %v971
          %v1006 = vld [vmem:[#allocation10] sm:$0xf]
          %v1007 = vld [vmem:[#allocation10 + $0x4] sm:$0xf]
          %v1008 = vld [vmem:[#allocation10 + $0x8] sm:$0xf]
          %v1009 = vld [vmem:[#allocation10 + $0xc] sm:$0xf]
          %v1010 = vld [vmem:[#allocation10 + $0x10] sm:$0xf]
          %v1011 = vld [vmem:[#allocation10 + $0x14] sm:$0xf]
          %v1012 = vld [vmem:[#allocation10 + $0x18] sm:$0xf]
          %v1013 = vld [vmem:[#allocation10 + $0x1c] sm:$0xf]
          %v1014 = vld [vmem:[#allocation10 + $0x20] sm:$0xf]
          %v1015 = vld [vmem:[#allocation10 + $0x24] sm:$0xf]
          %v1016 = vld [vmem:[#allocation10 + $0x28] sm:$0xf]
          %v1017 = vld [vmem:[#allocation10 + $0x2c] sm:$0xf]
          %v1018 = vld [vmem:[#allocation10 + $0x30] sm:$0xf]
          %v1019 = vld [vmem:[#allocation10 + $0x34] sm:$0xf]
          %v1020 = vld [vmem:[#allocation10 + $0x38] sm:$0xf]
          %v1021 = vld [vmem:[#allocation10 + $0x3c] sm:$0xf]
          %v1022 = vld [vmem:[%s7] sm:$0x1]
          %v1023 = vpack.c.bf16 %v991, %v990
          %v1024 = vpack.c.bf16 %v993, %v992
          %v1025 = vpack.c.bf16 %v995, %v994
          %v1026 = vpack.c.bf16 %v997, %v996
          %v1027 = vpack.c.bf16 %v999, %v998
          %v1028 = vpack.c.bf16 %v1001, %v1000
          %v1029 = vpack.c.bf16 %v1003, %v1002
          %v1030 = vpack.c.bf16 %v1005, %v1004
          %v1032 = vlaneseq
          %v1033 = vshrl.u32 %v1032, 7
          %v1034 = vsub.s32 0, %v1033
          %v1035 = vrot.slane %v1022, %v1034
          %v1053 = vunpack.c.l.b16 %v1006
          %v1054 = vunpack.c.l.b16 %v1007
          %v1055 = vunpack.c.l.b16 %v1008
          %v1056 = vunpack.c.l.b16 %v1009
          %v1057 = vunpack.c.l.b16 %v1010
          %v1058 = vunpack.c.l.b16 %v1011
          %v1059 = vunpack.c.l.b16 %v1012
          %v1060 = vunpack.c.l.b16 %v1013
          %v1061 = vunpack.c.l.b16 %v1014
          %v1062 = vunpack.c.l.b16 %v1015
          %v1063 = vunpack.c.l.b16 %v1016
          %v1064 = vunpack.c.l.b16 %v1017
          %v1065 = vunpack.c.l.b16 %v1018
          %v1066 = vunpack.c.l.b16 %v1019
          %v1067 = vunpack.c.l.b16 %v1020
          %v1068 = vunpack.c.l.b16 %v1021
          %v1069 = vpack.c.b16 %v1054, %v1053
          %v1070 = vpack.c.b16 %v1056, %v1055
          %v1071 = vpack.c.b16 %v1058, %v1057
          %v1072 = vpack.c.b16 %v1060, %v1059
          %v1073 = vpack.c.b16 %v1062, %v1061
          %v1074 = vpack.c.b16 %v1064, %v1063
          %v1075 = vpack.c.b16 %v1066, %v1065
          %v1076 = vpack.c.b16 %v1068, %v1067
          %1085 = vmatprep.subr.bf16.mxu0 0
          %1086 = vmatpush1.bf16.msra.mxu0 %v1069
          %1087 = vmatprep.subr.bf16.mxu0 0
          %1088 = vmatpush1.bf16.msra.mxu0 %v1070
          %1089 = vmatprep.subr.bf16.mxu0 0
          %1090 = vmatpush1.bf16.msra.mxu0 %v1071
          %1091 = vmatprep.subr.bf16.mxu0 0
          %1092 = vmatpush1.bf16.msra.mxu0 %v1072
          %1093 = vmatprep.subr.bf16.mxu0 0
          %1094 = vmatpush1.bf16.msra.mxu0 %v1073
          %1095 = vmatprep.subr.bf16.mxu0 0
          %1096 = vmatpush1.bf16.msra.mxu0 %v1074
          %1097 = vmatprep.subr.bf16.mxu0 0
          %1098 = vmatpush1.bf16.msra.mxu0 %v1075
          %1099 = vmatprep.subr.bf16.mxu0 0
          %1100 = vmatpush1.bf16.msra.mxu0 %v1076
          %1101 = vmatprep.subr.bf16.mxu0 0
          %1102 = vmatpush1.bf16.msra.mxu0 0
          %1103 = vmatprep.subr.bf16.mxu0 0
          %1104 = vmatpush1.bf16.msra.mxu0 0
          %1105 = vmatprep.subr.bf16.mxu0 0
          %1106 = vmatpush1.bf16.msra.mxu0 0
          %1107 = vmatprep.subr.bf16.mxu0 0
          %1108 = vmatpush1.bf16.msra.mxu0 0
          %1109 = vmatprep.subr.bf16.mxu0 0
          %1110 = vmatpush1.bf16.msra.mxu0 0
          %1111 = vmatprep.subr.bf16.mxu0 0
          %1112 = vmatpush1.bf16.msra.mxu0 0
          %1113 = vmatprep.subr.bf16.mxu0 0
          %1114 = vmatpush1.bf16.msra.mxu0 0
          %1115 = vmatprep.subr.bf16.mxu0 0
          %1116 = vmatpush1.bf16.msra.mxu0 0
          %1117 = vmatprep.mubr.bf16.mxu0 0
          %1118 = vmatmul.mubr.bf16.gmra.mrb[0].mxu0 %v1023
          %v1119 = vpop.f32.mrb[0].mxu0
          %v1120 = vadd.f32 %v1035, %v1119
          %v1121 = vpop.f32.mrb[0].mxu0
          %v1122 = vpop.f32.mrb[0].mxu0
          %v1123 = vadd.f32 %v1035, %v1122
          %v1124 = vpop.f32.mrb[0].mxu0
          %1125 = vmatprep.mubr.bf16.mxu0 0
          %1126 = vmatmul.mubr.bf16.gmra.mrb[0].mxu0 %v1024
          %v1127 = vpop.f32.mrb[0].mxu0
          %v1128 = vadd.f32 %v1035, %v1127
          %v1129 = vpop.f32.mrb[0].mxu0
          %v1130 = vpop.f32.mrb[0].mxu0
          %v1131 = vadd.f32 %v1035, %v1130
          %v1132 = vpop.f32.mrb[0].mxu0
          %1133 = vmatprep.mubr.bf16.mxu0 0
          %1134 = vmatmul.mubr.bf16.gmra.mrb[0].mxu0 %v1025
          %v1135 = vpop.f32.mrb[0].mxu0
          %v1136 = vadd.f32 %v1035, %v1135
          %v1137 = vpop.f32.mrb[0].mxu0
          %v1138 = vpop.f32.mrb[0].mxu0
          %v1139 = vadd.f32 %v1035, %v1138
          %v1140 = vpop.f32.mrb[0].mxu0
          %1141 = vmatprep.mubr.bf16.mxu0 0
          %1142 = vmatmul.mubr.bf16.gmra.mrb[0].mxu0 %v1026
          %v1143 = vpop.f32.mrb[0].mxu0
          %v1144 = vadd.f32 %v1035, %v1143
          %v1145 = vpop.f32.mrb[0].mxu0
          %v1146 = vpop.f32.mrb[0].mxu0
          %v1147 = vadd.f32 %v1035, %v1146
          %v1148 = vpop.f32.mrb[0].mxu0
          %1149 = vmatprep.mubr.bf16.mxu0 0
          %1150 = vmatmul.mubr.bf16.gmra.mrb[0].mxu0 %v1027
          %v1151 = vpop.f32.mrb[0].mxu0
          %v1152 = vadd.f32 %v1035, %v1151
          %v1153 = vpop.f32.mrb[0].mxu0
          %v1154 = vpop.f32.mrb[0].mxu0
          %v1155 = vadd.f32 %v1035, %v1154
          %v1156 = vpop.f32.mrb[0].mxu0
          %1157 = vmatprep.mubr.bf16.mxu0 0
          %1158 = vmatmul.mubr.bf16.gmra.mrb[0].mxu0 %v1028
          %v1159 = vpop.f32.mrb[0].mxu0
          %v1160 = vadd.f32 %v1035, %v1159
          %v1161 = vpop.f32.mrb[0].mxu0
          %v1162 = vpop.f32.mrb[0].mxu0
          %v1163 = vadd.f32 %v1035, %v1162
          %v1164 = vpop.f32.mrb[0].mxu0
          %1165 = vmatprep.mubr.bf16.mxu0 0
          %1166 = vmatmul.mubr.bf16.gmra.mrb[0].mxu0 %v1029
          %v1167 = vpop.f32.mrb[0].mxu0
          %v1168 = vadd.f32 %v1035, %v1167
          %v1169 = vpop.f32.mrb[0].mxu0
          %v1170 = vpop.f32.mrb[0].mxu0
          %v1171 = vadd.f32 %v1035, %v1170
          %v1172 = vpop.f32.mrb[0].mxu0
          %1173 = vmatprep.mubr.bf16.mxu0 0
          %1174 = vmatmul.mubr.bf16.gmra.mrb[0].mxu0 %v1030
          %v1175 = vpop.f32.mrb[0].mxu0
          %v1176 = vadd.f32 %v1035, %v1175
          %v1177 = vpop.f32.mrb[0].mxu0
          %v1178 = vpop.f32.mrb[0].mxu0
          %v1179 = vadd.f32 %v1035, %v1178
          %v1180 = vpop.f32.mrb[0].mxu0
          %1181 = vdwg.mxu0
          %v1182 = vmax.f32 %v1120, 0.0
          %v1183 = vmax.f32 %v1123, 0.0
          %v1184 = vmax.f32 %v1128, 0.0
          %v1185 = vmax.f32 %v1131, 0.0
          %v1186 = vmax.f32 %v1136, 0.0
          %v1187 = vmax.f32 %v1139, 0.0
          %v1188 = vmax.f32 %v1144, 0.0
          %v1189 = vmax.f32 %v1147, 0.0
          %v1190 = vmax.f32 %v1152, 0.0
          %v1191 = vmax.f32 %v1155, 0.0
          %v1192 = vmax.f32 %v1160, 0.0
          %v1193 = vmax.f32 %v1163, 0.0
          %v1194 = vmax.f32 %v1168, 0.0
          %v1195 = vmax.f32 %v1171, 0.0
          %v1196 = vmax.f32 %v1176, 0.0
          %v1197 = vmax.f32 %v1179, 0.0
          %v1198 = vld [vmem:[#allocation12] sm:$0xf]
          %v1199 = vld [vmem:[#allocation12 + $0x4] sm:$0xf]
          %v1200 = vld [vmem:[#allocation12 + $0x8] sm:$0xf]
          %v1201 = vld [vmem:[#allocation12 + $0xc] sm:$0xf]
          %v1202 = vld [vmem:[#allocation12 + $0x10] sm:$0xf]
          %v1203 = vld [vmem:[#allocation12 + $0x14] sm:$0xf]
          %v1204 = vld [vmem:[#allocation12 + $0x18] sm:$0xf]
          %v1205 = vld [vmem:[#allocation12 + $0x1c] sm:$0xf]
          %v1206 = vld [vmem:[#allocation12 + $0x20] sm:$0xf]
          %v1207 = vld [vmem:[#allocation12 + $0x24] sm:$0xf]
          %v1208 = vld [vmem:[#allocation12 + $0x28] sm:$0xf]
          %v1209 = vld [vmem:[#allocation12 + $0x2c] sm:$0xf]
          %v1210 = vld [vmem:[#allocation12 + $0x30] sm:$0xf]
          %v1211 = vld [vmem:[#allocation12 + $0x34] sm:$0xf]
          %v1212 = vld [vmem:[#allocation12 + $0x38] sm:$0xf]
          %v1213 = vld [vmem:[#allocation12 + $0x3c] sm:$0xf]
          %v1214 = vld [vmem:[%s9] sm:$0x1]
          %v1215 = vpack.c.bf16 %v1183, %v1182
          %v1216 = vpack.c.bf16 %v1185, %v1184
          %v1217 = vpack.c.bf16 %v1187, %v1186
          %v1218 = vpack.c.bf16 %v1189, %v1188
          %v1219 = vpack.c.bf16 %v1191, %v1190
          %v1220 = vpack.c.bf16 %v1193, %v1192
          %v1221 = vpack.c.bf16 %v1195, %v1194
          %v1222 = vpack.c.bf16 %v1197, %v1196
          %v1224 = vlaneseq
          %v1225 = vshrl.u32 %v1224, 7
          %v1226 = vsub.s32 0, %v1225
          %v1227 = vrot.slane %v1214, %v1226
          %v1245 = vunpack.c.l.b16 %v1198
          %v1246 = vunpack.c.l.b16 %v1199
          %v1247 = vunpack.c.l.b16 %v1200
          %v1248 = vunpack.c.l.b16 %v1201
          %v1249 = vunpack.c.l.b16 %v1202
          %v1250 = vunpack.c.l.b16 %v1203
          %v1251 = vunpack.c.l.b16 %v1204
          %v1252 = vunpack.c.l.b16 %v1205
          %v1253 = vunpack.c.l.b16 %v1206
          %v1254 = vunpack.c.l.b16 %v1207
          %v1255 = vunpack.c.l.b16 %v1208
          %v1256 = vunpack.c.l.b16 %v1209
          %v1257 = vunpack.c.l.b16 %v1210
          %v1258 = vunpack.c.l.b16 %v1211
          %v1259 = vunpack.c.l.b16 %v1212
          %v1260 = vunpack.c.l.b16 %v1213
          %v1261 = vpack.c.b16 %v1246, %v1245
          %v1262 = vpack.c.b16 %v1248, %v1247
          %v1263 = vpack.c.b16 %v1250, %v1249
          %v1264 = vpack.c.b16 %v1252, %v1251
          %v1265 = vpack.c.b16 %v1254, %v1253
          %v1266 = vpack.c.b16 %v1256, %v1255
          %v1267 = vpack.c.b16 %v1258, %v1257
          %v1268 = vpack.c.b16 %v1260, %v1259
          %1277 = vmatprep.subr.bf16.mxu0 0
          %1278 = vmatpush1.bf16.msra.mxu0 %v1261
          %1279 = vmatprep.subr.bf16.mxu0 0
          %1280 = vmatpush1.bf16.msra.mxu0 %v1262
          %1281 = vmatprep.subr.bf16.mxu0 0
          %1282 = vmatpush1.bf16.msra.mxu0 %v1263
          %1283 = vmatprep.subr.bf16.mxu0 0
          %1284 = vmatpush1.bf16.msra.mxu0 %v1264
          %1285 = vmatprep.subr.bf16.mxu0 0
          %1286 = vmatpush1.bf16.msra.mxu0 %v1265
          %1287 = vmatprep.subr.bf16.mxu0 0
          %1288 = vmatpush1.bf16.msra.mxu0 %v1266
          %1289 = vmatprep.subr.bf16.mxu0 0
          %1290 = vmatpush1.bf16.msra.mxu0 %v1267
          %1291 = vmatprep.subr.bf16.mxu0 0
          %1292 = vmatpush1.bf16.msra.mxu0 %v1268
          %1293 = vmatprep.subr.bf16.mxu0 0
          %1294 = vmatpush1.bf16.msra.mxu0 0
          %1295 = vmatprep.subr.bf16.mxu0 0
          %1296 = vmatpush1.bf16.msra.mxu0 0
          %1297 = vmatprep.subr.bf16.mxu0 0
          %1298 = vmatpush1.bf16.msra.mxu0 0
          %1299 = vmatprep.subr.bf16.mxu0 0
          %1300 = vmatpush1.bf16.msra.mxu0 0
          %1301 = vmatprep.subr.bf16.mxu0 0
          %1302 = vmatpush1.bf16.msra.mxu0 0
          %1303 = vmatprep.subr.bf16.mxu0 0
          %1304 = vmatpush1.bf16.msra.mxu0 0
          %1305 = vmatprep.subr.bf16.mxu0 0
          %1306 = vmatpush1.bf16.msra.mxu0 0
          %1307 = vmatprep.subr.bf16.mxu0 0
          %1308 = vmatpush1.bf16.msra.mxu0 0
          %1309 = vmatprep.mubr.bf16.mxu0 0
          %1310 = vmatmul.mubr.bf16.gmra.mrb[0].mxu0 %v1215
          %v1311 = vpop.f32.mrb[0].mxu0
          %v1312 = vadd.f32 %v1227, %v1311
          %v1313 = vpop.f32.mrb[0].mxu0
          %v1314 = vpop.f32.mrb[0].mxu0
          %v1315 = vadd.f32 %v1227, %v1314
          %v1316 = vpop.f32.mrb[0].mxu0
          %1317 = vmatprep.mubr.bf16.mxu0 0
          %1318 = vmatmul.mubr.bf16.gmra.mrb[0].mxu0 %v1216
          %v1319 = vpop.f32.mrb[0].mxu0
          %v1320 = vadd.f32 %v1227, %v1319
          %v1321 = vpop.f32.mrb[0].mxu0
          %v1322 = vpop.f32.mrb[0].mxu0
          %v1323 = vadd.f32 %v1227, %v1322
          %v1324 = vpop.f32.mrb[0].mxu0
          %1325 = vmatprep.mubr.bf16.mxu0 0
          %1326 = vmatmul.mubr.bf16.gmra.mrb[0].mxu0 %v1217
          %v1327 = vpop.f32.mrb[0].mxu0
          %v1328 = vadd.f32 %v1227, %v1327
          %v1329 = vpop.f32.mrb[0].mxu0
          %v1330 = vpop.f32.mrb[0].mxu0
          %v1331 = vadd.f32 %v1227, %v1330
          %v1332 = vpop.f32.mrb[0].mxu0
          %1333 = vmatprep.mubr.bf16.mxu0 0
          %1334 = vmatmul.mubr.bf16.gmra.mrb[0].mxu0 %v1218
          %v1335 = vpop.f32.mrb[0].mxu0
          %v1336 = vadd.f32 %v1227, %v1335
          %v1337 = vpop.f32.mrb[0].mxu0
          %v1338 = vpop.f32.mrb[0].mxu0
          %v1339 = vadd.f32 %v1227, %v1338
          %v1340 = vpop.f32.mrb[0].mxu0
          %1341 = vmatprep.mubr.bf16.mxu0 0
          %1342 = vmatmul.mubr.bf16.gmra.mrb[0].mxu0 %v1219
          %v1343 = vpop.f32.mrb[0].mxu0
          %v1344 = vadd.f32 %v1227, %v1343
          %v1345 = vpop.f32.mrb[0].mxu0
          %v1346 = vpop.f32.mrb[0].mxu0
          %v1347 = vadd.f32 %v1227, %v1346
          %v1348 = vpop.f32.mrb[0].mxu0
          %1349 = vmatprep.mubr.bf16.mxu0 0
          %1350 = vmatmul.mubr.bf16.gmra.mrb[0].mxu0 %v1220
          %v1351 = vpop.f32.mrb[0].mxu0
          %v1352 = vadd.f32 %v1227, %v1351
          %v1353 = vpop.f32.mrb[0].mxu0
          %v1354 = vpop.f32.mrb[0].mxu0
          %v1355 = vadd.f32 %v1227, %v1354
          %v1356 = vpop.f32.mrb[0].mxu0
          %1357 = vmatprep.mubr.bf16.mxu0 0
          %1358 = vmatmul.mubr.bf16.gmra.mrb[0].mxu0 %v1221
          %v1359 = vpop.f32.mrb[0].mxu0
          %v1360 = vadd.f32 %v1227, %v1359
          %v1361 = vpop.f32.mrb[0].mxu0
          %v1362 = vpop.f32.mrb[0].mxu0
          %v1363 = vadd.f32 %v1227, %v1362
          %v1364 = vpop.f32.mrb[0].mxu0
          %1365 = vmatprep.mubr.bf16.mxu0 0
          %1366 = vmatmul.mubr.bf16.gmra.mrb[0].mxu0 %v1222
          %v1367 = vpop.f32.mrb[0].mxu0
          %v1368 = vadd.f32 %v1227, %v1367
          %v1369 = vpop.f32.mrb[0].mxu0
          %v1370 = vpop.f32.mrb[0].mxu0
          %v1371 = vadd.f32 %v1227, %v1370
          %v1372 = vpop.f32.mrb[0].mxu0
          %1373 = vdwg.mxu0
          %1374 = vst [vmem:[%s488] sm:$0xff] %v1312
          %1375 = vst [vmem:[%s488 + $0x8] sm:$0xff] %v1315
          %1376 = vst [vmem:[%s488 + $0x10] sm:$0xff] %v1320
          %1377 = vst [vmem:[%s488 + $0x18] sm:$0xff] %v1323
          %1378 = vst [vmem:[%s488 + $0x20] sm:$0xff] %v1328
          %1379 = vst [vmem:[%s488 + $0x28] sm:$0xff] %v1331
          %1380 = vst [vmem:[%s488 + $0x30] sm:$0xff] %v1336
          %1381 = vst [vmem:[%s488 + $0x38] sm:$0xff] %v1339
          %1382 = vst [vmem:[%s488 + $0x40] sm:$0xff] %v1344
          %1383 = vst [vmem:[%s488 + $0x48] sm:$0xff] %v1347
          %1384 = vst [vmem:[%s488 + $0x50] sm:$0xff] %v1352
          %1385 = vst [vmem:[%s488 + $0x58] sm:$0xff] %v1355
          %1386 = vst [vmem:[%s488 + $0x60] sm:$0xff] %v1360
          %1387 = vst [vmem:[%s488 + $0x68] sm:$0xff] %v1363
          %1388 = vst [vmem:[%s488 + $0x70] sm:$0xff] %v1368
          %1389 = vst [vmem:[%s488 + $0x78] sm:$0xff] %v1371
        $region92: #{tpu_custom_call.1} parent=59 // pred_fallthru
          _
        %s1390 = sand.u32 %s271, 1
        %s1391 = scalar_lea.sflag [#allocation5], %s1390
        %s1392 = sand.u32 %s271, 1
        %s1393 = smul.addr %s1392, 128
        %s1394 = scalar_lea.vmem [#allocation13], %s1393
        // Predicated region
        $region93: #{tpu_custom_call.1} parent=59 // pred_check
          %p1395 = pneg %p281
        $region94: #{tpu_custom_call.1} parent=59 // pred_check_branch
          %1397 = sbr.rel (%p1395) target = $region96
        $region95: #{tpu_custom_call.1} parent=59 // pred_region
          %s1398 = smul.u32 16, %s33
          %s1400 = ssub.s32 2048, 2048
          %1401 = vsyncadd %s1391, %s1400
          %s1402 = smul.addr %s1398, 128
          %s1403 = scalar_lea.hbm %s10, %s1402
          %s1404 = sshll.u32 %s1394, 4
          %s1405 = int_to_ptr.vmem [resolvable:$true] %s1404
          %1410 = dma.vmem_to_hbm [thread:$0]  %s1405, 2048, %s1403, %s1391, 128, 128, 8
        $region96: #{tpu_custom_call.1} parent=59 // pred_fallthru
          _
      $region60: #{tpu_custom_call.1} parent=5 // pred_fallthru
        _
      %p1411 = scmp.le.s32.totalorder 2, %s24
      // Predicated region
      $region97: #{tpu_custom_call.1} parent=5 // pred_check
        %p1412 = pneg %p1411
      $region98: #{tpu_custom_call.1} parent=5 // pred_check_branch
        %1414 = sbr.rel (%p1412) target = $region100
      $region99: #{tpu_custom_call.1} parent=5 // pred_region
        %s1415 = ssub.s32 %s24, 2
        // Predicated region
        $region101: #{tpu_custom_call.1} parent=99 // pred_check
          %p1416 = pneg %p287
        $region102: #{tpu_custom_call.1} parent=99 // pred_check_branch
          %1418 = sbr.rel (%p1416) target = $region104
        $region103: #{tpu_custom_call.1} parent=99 // pred_region
          %s1419 = sand.u32 %s272, 1
          %s1420 = scalar_lea.sflag [#allocation5], %s1419
          %s1421 = sand.u32 %s272, 1
          %s1422 = smul.addr %s1421, 128
          %s1423 = scalar_lea.vmem [#allocation13], %s1422
          %1424 = dma.done %s1420, 2048
        $region104: #{tpu_custom_call.1} parent=99 // pred_fallthru
          _
      $region100: #{tpu_custom_call.1} parent=5 // pred_fallthru
        _
    $region6: #{tpu_custom_call.1} parent=1 // loop_footer
      %s28 = sadd.s32 1, %s24
    $region7: #{tpu_custom_call.1} parent=1 // loop_footer_branch
      %23 = sbr.rel target = $region3
    $region8: #{tpu_custom_call.1} parent=1 // loop_exit
      _
    %1425 = vsyncpa [#allocation4], 1
    %s1426 = scalar_lea.sflag [#allocation4], 1
    %1427 = vsyncpa %s1426, 1
    %1428 = vsyncpa [#allocation7], 1
    %1429 = vsyncpa [#allocation11], 1
    %1430 = vsyncpa [#allocation5], 1
    %s1431 = scalar_lea.sflag [#allocation5], 1
    %1432 = vsyncpa %s1431, 1

</llo_original>
